<compile_context>
chip_gen: v7x
topology: tpu7x:2x2x1
jax: 0.10.0
libtpu: 0.0.40
codegen_flags: <defaults>
</compile_context>

<pallas_src>
import functools

import jax
import jax.numpy as jnp
from jax import lax
from jax.experimental import pallas as pl
from jax.experimental.pallas import tpu as pltpu


def _round_up(x, m):
    return ((x + m - 1) // m) * m


def _cdiv(a, b):
    return (a + b - 1) // b


# ----------------------------------------------------------------------------
# Fused kernel, one (batch tile, K tile) grid step:
#   acc += x_k @ We_k                                  (K-tiled encoder GEMM)
#   at last K step:
#     h      = relu(acc + be)                          (synthetic backbone)
#     t      = relu(h @ [w1|w3] + [b1|b3])             (both projector fc1, fused)
#     z      = t[:, :rp] @ w2 + b2                     (instance fc2)
#     logits = t[:, rp:] @ w4 + b4                     (cluster fc2; pad bias=-1e30)
#     out    = [ l2_normalize(z) | softmax(logits) ]
# ----------------------------------------------------------------------------
def _network_kernel(x_ref, we_ref, be_ref, w13_ref, b13_ref,
                    w2_ref, b2_ref, w4_ref, b4_ref,
                    out_ref, acc_ref, *, nk, rp, fp):
    k = pl.program_id(1)

    # x arrives f32; cast to bf16 on-chip right before the MXU.
    partial = jnp.dot(x_ref[...].astype(jnp.bfloat16), we_ref[...],
                      preferred_element_type=jnp.float32)

    @pl.when(k == 0)
    def _init():
        acc_ref[...] = jnp.zeros_like(acc_ref)

    acc_ref[...] += partial

    @pl.when(k == nk - 1)
    def _epilogue():
        # encoder activation
        h = jnp.maximum(acc_ref[...] + be_ref[...], 0.0).astype(jnp.bfloat16)

        # fused projector fc1 (instance | cluster)
        t = jnp.dot(h, w13_ref[...], preferred_element_type=jnp.float32)
        t = jnp.maximum(t + b13_ref[...], 0.0).astype(jnp.bfloat16)

        # projector fc2: two narrow dots (no zero-block FLOPs; v5e-friendly)
        z = jnp.dot(t[:, :rp], w2_ref[...],
                    preferred_element_type=jnp.float32) + b2_ref[...]
        logits = jnp.dot(t[:, rp:], w4_ref[...],
                         preferred_element_type=jnp.float32) + b4_ref[...]

        # L2 normalize (torch F.normalize, eps=1e-12). Padded z columns are 0.
        sumsq = jnp.sum(z * z, axis=1, keepdims=True)
        out_ref[:, :fp] = z * lax.rsqrt(jnp.maximum(sumsq, 1e-24))

        # softmax; padded class columns carry a -1e30 bias so exp underflows to 0
        # (no iota / compare / select needed).
        m = jnp.max(logits, axis=1, keepdims=True)
        e = jnp.exp(logits - m)
        denom = jnp.sum(e, axis=1, keepdims=True)
        out_ref[:, fp:] = e * pl.reciprocal(denom, approx=False)


def _pack_params(params, d_in_p, rp, fp, kp):
    """Pad + fuse the 5 Linear layers into MXU-friendly bf16 weight slabs."""
    def pad2(w, r, c, fill=0.0):
        buf = jnp.full((r, c), fill, jnp.float32)
        return buf.at[:w.shape[0], :w.shape[1]].set(w.astype(jnp.float32))

    we = pad2(params["we"], d_in_p, rp).astype(jnp.bfloat16)
    be = pad2(params["be"], 1, rp)
    w13 = jnp.concatenate([pad2(params["w1"], rp, rp),
                           pad2(params["w3"], rp, rp)], axis=1).astype(jnp.bfloat16)
    b13 = jnp.concatenate([pad2(params["b1"], 1, rp),
                           pad2(params["b3"], 1, rp)], axis=1)
    w2 = pad2(params["w2"], rp, fp).astype(jnp.bfloat16)
    b2 = pad2(params["b2"], 1, fp)
    w4 = pad2(params["w4"], rp, kp).astype(jnp.bfloat16)
    b4 = pad2(params["b4"], 1, kp, fill=-1e30)   # bake class-pad mask into bias
    return we, be, w13, b13, w2, b2, w4, b4


_VMEM_TILE_BUDGET = 36 * 1024 * 1024   # tiling budget (headroom under scoped limit)
_VMEM_LIMIT_BYTES = 48 * 1024 * 1024   # > v5e's 16 MiB default, < v7x's 64 MiB physical


@functools.partial(
    jax.jit,
    static_argnames=("rep_dim", "feature_dim", "class_num", "single_buffer_weights"))
def _network_forward_impl(x_i, x_j, params, *, rep_dim, feature_dim, class_num,
                          single_buffer_weights):
    B = x_i.shape[0]
    d_in = x_i.shape[1] * x_i.shape[2] * x_i.shape[3]

    rp = _round_up(rep_dim, 128)
    fp = _round_up(feature_dim, 128)
    kp = _round_up(class_num, 128)

    rows = 2 * B
    # Batch tile: as large as possible (HBM roofline / per-step overhead) while
    # guaranteeing >=2 grid steps when the batch allows it (v7x second TC).
    tb = min(512, max(8, _round_up(_cdiv(rows, 2), 8)))
    rows_p = _round_up(rows, tb)

    # K-tile the encoder GEMM so x/We tiles always fit the VMEM budget.
    const_bytes = 2 * 2 * (rp * 2 * rp + rp * fp + rp * kp)   # resident weights (bf16 x2)
    const_bytes += 2 * 4 * (rp + 2 * rp + fp + kp)            # biases
    const_bytes += 2 * tb * (fp + kp) * 4                     # out tile (x2)
    const_bytes += tb * rp * 4                                # f32 accumulator
    const_bytes += tb * (4 * rp + fp + kp) * 4                # epilogue temporaries
    avail = max(_VMEM_TILE_BUDGET - const_bytes, 1 << 20)
    per_tk = tb * 4 * 2 + rp * 2 * 2     # x tile (f32, x2) + We tile (bf16, x2), per column
    tk_max = max(128, avail // per_tk)
    if tk_max >= d_in:
        tk, nk, d_in_p = d_in, 1, d_in   # single K step, no feature-axis padding
    else:
        tk = (tk_max // 128) * 128
        nk = _cdiv(d_in, tk)
        d_in_p = nk * tk

    # Stack both views on the batch axis; x stays f32 and unpadded when possible.
    xi = x_i.reshape(B, -1)
    xj = x_j.reshape(B, -1)
    if rows_p == rows and d_in_p == d_in:
        x = jnp.concatenate([xi, xj], axis=0)
    else:
        x = jnp.zeros((rows_p, d_in_p), xi.dtype)
        x = x.at[:B, :d_in].set(xi).at[B:rows, :d_in].set(xj)

    we, be, w13, b13, w2, b2, w4, b4 = _pack_params(params, d_in_p, rp, fp, kp)

    def const_spec(shape):
        # Constant-index weights/biases: single-buffer when supported (VMEM saver).
        if single_buffer_weights:
            return pl.BlockSpec(shape, lambda i, k: (0, 0),
                                pipeline_mode=pl.Buffered(1))
        return pl.BlockSpec(shape, lambda i, k: (0, 0))

    if single_buffer_weights and nk == 1:
        we_spec = pl.BlockSpec((tk, rp), lambda i, k: (k, 0),
                               pipeline_mode=pl.Buffered(1))
    else:
        we_spec = pl.BlockSpec((tk, rp), lambda i, k: (k, 0))

    kernel = functools.partial(_network_kernel, nk=nk, rp=rp, fp=fp)
    grid = (rows_p // tb, nk)

    flops = 2 * rows_p * (d_in_p * rp + rp * 2 * rp + rp * fp + rp * kp)
    bytes_accessed = (x.size * x.dtype.itemsize
                      + (we.size + w13.size + w2.size + w4.size) * 2
                      + (be.size + b13.size + b2.size + b4.size) * 4
                      + rows_p * (fp + kp) * 4)

    out = pl.pallas_call(
        kernel,
        out_shape=jax.ShapeDtypeStruct((rows_p, fp + kp), jnp.float32),
        grid_spec=pltpu.PrefetchScalarGridSpec(
            num_scalar_prefetch=0,
            grid=grid,
            in_specs=[
                pl.BlockSpec((tb, tk), lambda i, k: (i, k)),   # x tile (f32)
                we_spec,                                       # encoder weights
                const_spec((1, rp)),                           # be
                const_spec((rp, 2 * rp)),                      # [w1 | w3]
                const_spec((1, 2 * rp)),                       # [b1 | b3]
                const_spec((rp, fp)),                          # w2
                const_spec((1, fp)),                           # b2
                const_spec((rp, kp)),                          # w4
                const_spec((1, kp)),                           # b4 (mask baked in)
            ],
            out_specs=pl.BlockSpec((tb, fp + kp), lambda i, k: (i, 0)),
            scratch_shapes=[pltpu.VMEM((tb, rp), jnp.float32)],
        ),
        compiler_params=pltpu.CompilerParams(
            dimension_semantics=("parallel", "arbitrary"),
            vmem_limit_bytes=_VMEM_LIMIT_BYTES),
        cost_estimate=pl.CostEstimate(
            flops=flops,
            transcendentals=rows_p * (kp + 2),
            bytes_accessed=bytes_accessed),
    )(x, we, be, w13, b13, w2, b2, w4, b4)

    z_all = out[:rows, :feature_dim]
    c_all = out[:rows, fp:fp + class_num]
    return z_all[:B], z_all[B:], c_all[:B], c_all[B:]


def network_forward(x_i, x_j, params, *, rep_dim, feature_dim, class_num):
    """Equivalent of Network.forward(x_i, x_j) -> (z_i, z_j, c_i, c_j)."""
    kw = dict(rep_dim=rep_dim, feature_dim=feature_dim, class_num=class_num)
    try:
        out = _network_forward_impl(x_i, x_j, params,
                                    single_buffer_weights=True, **kw)
        jax.block_until_ready(out)
        return out
    except Exception:
        # pl.Buffered / pipeline_mode not available on this jax version: fall back
        # to the default double-buffered specs (identical results, more VMEM).
        return _network_forward_impl(x_i, x_j, params,
                                     single_buffer_weights=False, **kw)


# ----------------------------------------------------------------------------
# Pure-JAX reference (f32) for validation.
# ----------------------------------------------------------------------------
def reference_forward(x_i, x_j, params):
    def branch(x):
        xf = x.reshape(x.shape[0], -1)
        h = jax.nn.relu(xf @ params["we"] + params["be"])
        t = jax.nn.relu(h @ params["w1"] + params["b1"])
        z = t @ params["w2"] + params["b2"]
        z = z / jnp.maximum(jnp.linalg.norm(z, axis=1, keepdims=True), 1e-12)
        u = jax.nn.relu(h @ params["w3"] + params["b3"])
        c = jax.nn.softmax(u @ params["w4"] + params["b4"], axis=1)
        return z, c
    z_i, c_i = branch(x_i)
    z_j, c_j = branch(x_j)
    return z_i, z_j, c_i, c_j


def init_params(key, d_in, rep_dim, feature_dim, class_num):
    """Deterministic synthetic parameter init (small uniform, like torch Linear)."""
    ks = jax.random.split(key, 10)

    def lin(kw, kb, fan_in, fan_out):
        bound = 1.0 / jnp.sqrt(jnp.float32(fan_in))
        w = jax.random.uniform(kw, (fan_in, fan_out), jnp.float32, -bound, bound)
        b = jax.random.uniform(kb, (1, fan_out), jnp.float32, -bound, bound)
        return w, b

    we, be = lin(ks[0], ks[1], d_in, rep_dim)          # synthetic backbone
    w1, b1 = lin(ks[2], ks[3], rep_dim, rep_dim)       # instance_projector[0]
    w2, b2 = lin(ks[4], ks[5], rep_dim, feature_dim)   # instance_projector[2]
    w3, b3 = lin(ks[6], ks[7], rep_dim, rep_dim)       # cluster_projector[0]
    w4, b4 = lin(ks[8], ks[9], rep_dim, class_num)     # cluster_projector[2]
    return dict(we=we, be=be, w1=w1, b1=b1, w2=w2, b2=b2,
                w3=w3, b3=b3, w4=w4, b4=b4)


if __name__ == "__main__":
    # Small shapes consistent with the module's forward.
    B, C, H, W = 2, 4, 16, 16
    rep_dim, feature_dim, class_num = 32, 16, 8
    d_in = C * H * W

    key = jax.random.PRNGKey(0)
    k_xi, k_xj, k_p = jax.random.split(key, 3)
    x_i = jax.random.normal(k_xi, (B, C, H, W), jnp.float32)   # NCHW
    x_j = jax.random.normal(k_xj, (B, C, H, W), jnp.float32)   # NCHW
    params = init_params(k_p, d_in, rep_dim, feature_dim, class_num)

    z_i, z_j, c_i, c_j = network_forward(
        x_i, x_j, params,
        rep_dim=rep_dim, feature_dim=feature_dim, class_num=class_num)
    jax.block_until_ready((z_i, z_j, c_i, c_j))

    # Structural checks: shapes, unit-norm z rows, softmax rows sum to 1.
    assert z_i.shape == (B, feature_dim) and z_j.shape == (B, feature_dim)
    assert c_i.shape == (B, class_num) and c_j.shape == (B, class_num)
    assert jnp.allclose(jnp.linalg.norm(z_i, axis=1), 1.0, atol=5e-3)
    assert jnp.allclose(jnp.linalg.norm(z_j, axis=1), 1.0, atol=5e-3)
    assert jnp.allclose(jnp.sum(c_i, axis=1), 1.0, atol=5e-3)
    assert jnp.allclose(jnp.sum(c_j, axis=1), 1.0, atol=5e-3)

    # Numerical check vs pure-JAX f32 reference (bf16 weight path -> loose tol).
    rz_i, rz_j, rc_i, rc_j = reference_forward(x_i, x_j, params)
    for got, ref in ((z_i, rz_i), (z_j, rz_j), (c_i, rc_i), (c_j, rc_j)):
        assert jnp.allclose(got, ref, atol=5e-2), float(jnp.max(jnp.abs(got - ref)))

    print("KERNEL_OK")
</pallas_src>

<mosaic_0001>
module attributes {stable_mosaic.version = 11 : i64} {
  func.func @_network_kernel(%arg0: i32, %arg1: i32, %arg2: memref<8x1024xf32, #tpu.memory_space<vmem>>, %arg3: memref<1024x128xbf16, #tpu.memory_space<vmem>>, %arg4: memref<1x128xf32, #tpu.memory_space<vmem>>, %arg5: memref<128x256xbf16, #tpu.memory_space<vmem>>, %arg6: memref<1x256xf32, #tpu.memory_space<vmem>>, %arg7: memref<128x128xbf16, #tpu.memory_space<vmem>>, %arg8: memref<1x128xf32, #tpu.memory_space<vmem>>, %arg9: memref<128x128xbf16, #tpu.memory_space<vmem>>, %arg10: memref<1x128xf32, #tpu.memory_space<vmem>>, %arg11: memref<8x256xf32, #tpu.memory_space<vmem>>, %arg12: memref<8x128xf32, #tpu.memory_space<vmem>>) attributes {dimension_semantics = [#tpu.dimension_semantics<parallel>, #tpu.dimension_semantics<arbitrary>], iteration_bounds = array<i64: 1, 1>, scalar_prefetch = 0 : i64, scratch_operands = 1 : i64, tpu.core_type = #tpu.core_type<tc>, window_params = [{transform_indices = @transform_0, window_bounds = array<i64: 8, 1024>}, {pipeline_mode = #tpu.pipeline_mode<synchronous>, transform_indices = @transform_1, window_bounds = array<i64: 1024, 128>}, {pipeline_mode = #tpu.pipeline_mode<synchronous>, transform_indices = @transform_2, window_bounds = array<i64: 1, 128>}, {pipeline_mode = #tpu.pipeline_mode<synchronous>, transform_indices = @transform_3, window_bounds = array<i64: 128, 256>}, {pipeline_mode = #tpu.pipeline_mode<synchronous>, transform_indices = @transform_4, window_bounds = array<i64: 1, 256>}, {pipeline_mode = #tpu.pipeline_mode<synchronous>, transform_indices = @transform_5, window_bounds = array<i64: 128, 128>}, {pipeline_mode = #tpu.pipeline_mode<synchronous>, transform_indices = @transform_6, window_bounds = array<i64: 1, 128>}, {pipeline_mode = #tpu.pipeline_mode<synchronous>, transform_indices = @transform_7, window_bounds = array<i64: 128, 128>}, {pipeline_mode = #tpu.pipeline_mode<synchronous>, transform_indices = @transform_8, window_bounds = array<i64: 1, 128>}, {transform_indices = @transform_9, window_bounds = array<i64: 8, 256>}]} {
    %c0 = arith.constant 0 : index
    %c0_0 = arith.constant 0 : index
    %0 = vector.load %arg2[%c0, %c0_0] : memref<8x1024xf32, #tpu.memory_space<vmem>>, vector<8x1024xf32>
    %1 = arith.truncf %0 : vector<8x1024xf32> to vector<8x1024xbf16>
    %c0_1 = arith.constant 0 : index
    %c0_2 = arith.constant 0 : index
    %2 = vector.load %arg3[%c0_1, %c0_2] : memref<1024x128xbf16, #tpu.memory_space<vmem>>, vector<1024x128xbf16>
    %cst = arith.constant dense<0.000000e+00> : vector<8x128xf32>
    %3 = tpu.matmul %1, %2, %cst {dimension_numbers = #tpu.dot_dimension_numbers<[1], [0], [0], [1], [0, 0, 1, 1], [], []>} : vector<8x1024xbf16>, vector<1024x128xbf16>, vector<8x128xf32> -> vector<8x128xf32>
    %c0_i32 = arith.constant 0 : i32
    %4 = arith.cmpi eq, %arg1, %c0_i32 : i32
    %5 = arith.extui %4 : i1 to i32
    %c0_i32_3 = arith.constant 0 : i32
    %6 = arith.cmpi ne, %5, %c0_i32_3 : i32
    scf.if %6 {
      %cst_10 = arith.constant 0.000000e+00 : f32
      %13 = vector.broadcast %cst_10 : f32 to vector<8x128xf32>
      %c0_11 = arith.constant 0 : index
      %c0_12 = arith.constant 0 : index
      %14 = vector.load %arg12[%c0_11, %c0_12] : memref<8x128xf32, #tpu.memory_space<vmem>>, vector<8x128xf32>
      tpu.vector_store %arg12[%c0_11, %c0_12], %13 {strides = array<i32>} : memref<8x128xf32, #tpu.memory_space<vmem>>, vector<8x128xf32>,
    } else {
    }
    %c0_4 = arith.constant 0 : index
    %c0_5 = arith.constant 0 : index
    %7 = vector.load %arg12[%c0_4, %c0_5] : memref<8x128xf32, #tpu.memory_space<vmem>>, vector<8x128xf32>
    %8 = arith.addf %7, %3 : vector<8x128xf32>
    %c0_6 = arith.constant 0 : index
    %c0_7 = arith.constant 0 : index
    %9 = vector.load %arg12[%c0_6, %c0_7] : memref<8x128xf32, #tpu.memory_space<vmem>>, vector<8x128xf32>
    tpu.vector_store %arg12[%c0_6, %c0_7], %8 {strides = array<i32>} : memref<8x128xf32, #tpu.memory_space<vmem>>, vector<8x128xf32>,
    %c0_i32_8 = arith.constant 0 : i32
    %10 = arith.cmpi eq, %arg1, %c0_i32_8 : i32
    %11 = arith.extui %10 : i1 to i32
    %c0_i32_9 = arith.constant 0 : i32
    %12 = arith.cmpi ne, %11, %c0_i32_9 : i32
    scf.if %12 {
      %c0_10 = arith.constant 0 : index
      %c0_11 = arith.constant 0 : index
      %13 = vector.load %arg12[%c0_10, %c0_11] : memref<8x128xf32, #tpu.memory_space<vmem>>, vector<8x128xf32>
      %c0_12 = arith.constant 0 : index
      %c0_13 = arith.constant 0 : index
      %14 = vector.load %arg4[%c0_12, %c0_13] : memref<1x128xf32, #tpu.memory_space<vmem>>, vector<1x128xf32>
      %15 = vector.broadcast %14 : vector<1x128xf32> to vector<8x128xf32>
      %16 = arith.addf %13, %15 : vector<8x128xf32>
      %cst_14 = arith.constant 0.000000e+00 : f32
      %17 = vector.broadcast %cst_14 : f32 to vector<8x128xf32>
      %18 = arith.maximumf %16, %17 : vector<8x128xf32>
      %19 = arith.truncf %18 : vector<8x128xf32> to vector<8x128xbf16>
      %c0_15 = arith.constant 0 : index
      %c0_16 = arith.constant 0 : index
      %20 = vector.load %arg5[%c0_15, %c0_16] : memref<128x256xbf16, #tpu.memory_space<vmem>>, vector<128x256xbf16>
      %cst_17 = arith.constant dense<0.000000e+00> : vector<8x256xf32>
      %21 = tpu.matmul %19, %20, %cst_17 {dimension_numbers = #tpu.dot_dimension_numbers<[1], [0], [0], [1], [0, 0, 1, 1], [], []>} : vector<8x128xbf16>, vector<128x256xbf16>, vector<8x256xf32> -> vector<8x256xf32>
      %c0_18 = arith.constant 0 : index
      %c0_19 = arith.constant 0 : index
      %22 = vector.load %arg6[%c0_18, %c0_19] : memref<1x256xf32, #tpu.memory_space<vmem>>, vector<1x256xf32>
      %23 = vector.broadcast %22 : vector<1x256xf32> to vector<8x256xf32>
      %24 = arith.addf %21, %23 : vector<8x256xf32>
      %cst_20 = arith.constant 0.000000e+00 : f32
      %25 = vector.broadcast %cst_20 : f32 to vector<8x256xf32>
      %26 = arith.maximumf %24, %25 : vector<8x256xf32>
      %27 = arith.truncf %26 : vector<8x256xf32> to vector<8x256xbf16>
      %28 = vector.extract_strided_slice %27 {offsets = [0, 0], sizes = [8, 128], strides = [1, 1]} : vector<8x256xbf16> to vector<8x128xbf16>
      %c0_21 = arith.constant 0 : index
      %c0_22 = arith.constant 0 : index
      %29 = vector.load %arg7[%c0_21, %c0_22] : memref<128x128xbf16, #tpu.memory_space<vmem>>, vector<128x128xbf16>
      %cst_23 = arith.constant dense<0.000000e+00> : vector<8x128xf32>
      %30 = tpu.matmul %28, %29, %cst_23 {dimension_numbers = #tpu.dot_dimension_numbers<[1], [0], [0], [1], [0, 0, 1, 1], [], []>} : vector<8x128xbf16>, vector<128x128xbf16>, vector<8x128xf32> -> vector<8x128xf32>
      %c0_24 = arith.constant 0 : index
      %c0_25 = arith.constant 0 : index
      %31 = vector.load %arg8[%c0_24, %c0_25] : memref<1x128xf32, #tpu.memory_space<vmem>>, vector<1x128xf32>
      %32 = vector.broadcast %31 : vector<1x128xf32> to vector<8x128xf32>
      %33 = arith.addf %30, %32 : vector<8x128xf32>
      %34 = vector.extract_strided_slice %27 {offsets = [0, 128], sizes = [8, 128], strides = [1, 1]} : vector<8x256xbf16> to vector<8x128xbf16>
      %c0_26 = arith.constant 0 : index
      %c0_27 = arith.constant 0 : index
      %35 = vector.load %arg9[%c0_26, %c0_27] : memref<128x128xbf16, #tpu.memory_space<vmem>>, vector<128x128xbf16>
      %cst_28 = arith.constant dense<0.000000e+00> : vector<8x128xf32>
      %36 = tpu.matmul %34, %35, %cst_28 {dimension_numbers = #tpu.dot_dimension_numbers<[1], [0], [0], [1], [0, 0, 1, 1], [], []>} : vector<8x128xbf16>, vector<128x128xbf16>, vector<8x128xf32> -> vector<8x128xf32>
      %c0_29 = arith.constant 0 : index
      %c0_30 = arith.constant 0 : index
      %37 = vector.load %arg10[%c0_29, %c0_30] : memref<1x128xf32, #tpu.memory_space<vmem>>, vector<1x128xf32>
      %38 = vector.broadcast %37 : vector<1x128xf32> to vector<8x128xf32>
      %39 = arith.addf %36, %38 : vector<8x128xf32>
      %40 = arith.mulf %33, %33 : vector<8x128xf32>
      %cst_31 = arith.constant dense<0.000000e+00> : vector<8xf32>
      %41 = vector.multi_reduction <add>, %40, %cst_31 [1] : vector<8x128xf32> to vector<8xf32>
      %42 = vector.shape_cast %41 : vector<8xf32> to vector<8x1xf32>
      %cst_32 = arith.constant 1.000000e-24 : f32
      %43 = vector.broadcast %cst_32 : f32 to vector<8x1xf32>
      %44 = arith.maximumf %42, %43 : vector<8x1xf32>
      %45 = math.rsqrt %44 : vector<8x1xf32>
      %46 = vector.broadcast %45 : vector<8x1xf32> to vector<8x128xf32>
      %47 = arith.mulf %33, %46 : vector<8x128xf32>
      %c0_33 = arith.constant 0 : index
      %c0_34 = arith.constant 0 : index
      %48 = vector.load %arg11[%c0_33, %c0_34] : memref<8x256xf32, #tpu.memory_space<vmem>>, vector<8x128xf32>
      tpu.vector_store %arg11[%c0_33, %c0_34], %47 {strides = array<i32>} : memref<8x256xf32, #tpu.memory_space<vmem>>, vector<8x128xf32>,
      %cst_35 = arith.constant dense<0xFF800000> : vector<8xf32>
      %49 = vector.multi_reduction <maximumf>, %39, %cst_35 [1] : vector<8x128xf32> to vector<8xf32>
      %50 = vector.shape_cast %49 : vector<8xf32> to vector<8x1xf32>
      %51 = vector.broadcast %50 : vector<8x1xf32> to vector<8x128xf32>
      %52 = arith.subf %39, %51 : vector<8x128xf32>
      %53 = math.exp %52 : vector<8x128xf32>
      %cst_36 = arith.constant dense<0.000000e+00> : vector<8xf32>
      %54 = vector.multi_reduction <add>, %53, %cst_36 [1] : vector<8x128xf32> to vector<8xf32>
      %55 = vector.shape_cast %54 : vector<8xf32> to vector<8x1xf32>
      %56 = tpu.reciprocal %55 : vector<8x1xf32> -> vector<8x1xf32>
      %57 = vector.broadcast %56 : vector<8x1xf32> to vector<8x128xf32>
      %58 = arith.mulf %53, %57 : vector<8x128xf32>
      %c0_37 = arith.constant 0 : index
      %c128 = arith.constant 128 : index
      %59 = vector.load %arg11[%c0_37, %c128] : memref<8x256xf32, #tpu.memory_space<vmem>>, vector<8x128xf32>
      tpu.vector_store %arg11[%c0_37, %c128], %58 {strides = array<i32>} : memref<8x256xf32, #tpu.memory_space<vmem>>, vector<8x128xf32>,
    } else {
    }
    return
  }
  func.func @transform_0(%arg0: i32, %arg1: i32) -> (i32, i32) {
    %c0_i32 = arith.constant 0 : i32
    return %arg0, %arg1 : i32, i32
  }
  func.func @transform_1(%arg0: i32, %arg1: i32) -> (i32, i32) {
    %c0_i32 = arith.constant 0 : i32
    %c0_i32_0 = arith.constant 0 : i32
    return %arg1, %c0_i32 : i32, i32
  }
  func.func @transform_2(%arg0: i32, %arg1: i32) -> (i32, i32) {
    %c0_i32 = arith.constant 0 : i32
    %c0_i32_0 = arith.constant 0 : i32
    %c0_i32_1 = arith.constant 0 : i32
    return %c0_i32, %c0_i32_0 : i32, i32
  }
  func.func @transform_3(%arg0: i32, %arg1: i32) -> (i32, i32) {
    %c0_i32 = arith.constant 0 : i32
    %c0_i32_0 = arith.constant 0 : i32
    %c0_i32_1 = arith.constant 0 : i32
    return %c0_i32, %c0_i32_0 : i32, i32
  }
  func.func @transform_4(%arg0: i32, %arg1: i32) -> (i32, i32) {
    %c0_i32 = arith.constant 0 : i32
    %c0_i32_0 = arith.constant 0 : i32
    %c0_i32_1 = arith.constant 0 : i32
    return %c0_i32, %c0_i32_0 : i32, i32
  }
  func.func @transform_5(%arg0: i32, %arg1: i32) -> (i32, i32) {
    %c0_i32 = arith.constant 0 : i32
    %c0_i32_0 = arith.constant 0 : i32
    %c0_i32_1 = arith.constant 0 : i32
    return %c0_i32, %c0_i32_0 : i32, i32
  }
  func.func @transform_6(%arg0: i32, %arg1: i32) -> (i32, i32) {
    %c0_i32 = arith.constant 0 : i32
    %c0_i32_0 = arith.constant 0 : i32
    %c0_i32_1 = arith.constant 0 : i32
    return %c0_i32, %c0_i32_0 : i32, i32
  }
  func.func @transform_7(%arg0: i32, %arg1: i32) -> (i32, i32) {
    %c0_i32 = arith.constant 0 : i32
    %c0_i32_0 = arith.constant 0 : i32
    %c0_i32_1 = arith.constant 0 : i32
    return %c0_i32, %c0_i32_0 : i32, i32
  }
  func.func @transform_8(%arg0: i32, %arg1: i32) -> (i32, i32) {
    %c0_i32 = arith.constant 0 : i32
    %c0_i32_0 = arith.constant 0 : i32
    %c0_i32_1 = arith.constant 0 : i32
    return %c0_i32, %c0_i32_0 : i32, i32
  }
  func.func @transform_9(%arg0: i32, %arg1: i32) -> (i32, i32) {
    %c0_i32 = arith.constant 0 : i32
    %c0_i32_0 = arith.constant 0 : i32
    return %arg0, %c0_i32 : i32, i32
  }
}

module attributes {stable_mosaic.version = 11 : i64} {
  func.func @_network_kernel(%arg0: i32, %arg1: i32, %arg2: memref<8x1024xf32, #tpu.memory_space<vmem>>, %arg3: memref<1024x128xbf16, #tpu.memory_space<vmem>>, %arg4: memref<1x128xf32, #tpu.memory_space<vmem>>, %arg5: memref<128x256xbf16, #tpu.memory_space<vmem>>, %arg6: memref<1x256xf32, #tpu.memory_space<vmem>>, %arg7: memref<128x128xbf16, #tpu.memory_space<vmem>>, %arg8: memref<1x128xf32, #tpu.memory_space<vmem>>, %arg9: memref<128x128xbf16, #tpu.memory_space<vmem>>, %arg10: memref<1x128xf32, #tpu.memory_space<vmem>>, %arg11: memref<8x256xf32, #tpu.memory_space<vmem>>, %arg12: memref<8x128xf32, #tpu.memory_space<vmem>>) attributes {dimension_semantics = [#tpu.dimension_semantics<parallel>, #tpu.dimension_semantics<arbitrary>], iteration_bounds = array<i64: 1, 1>, scalar_prefetch = 0 : i64, scratch_operands = 1 : i64, tpu.core_type = #tpu.core_type<tc>, window_params = [{transform_indices = @transform_0, window_bounds = array<i64: 8, 1024>}, {transform_indices = @transform_1, window_bounds = array<i64: 1024, 128>}, {pipeline_mode = #tpu.pipeline_mode<synchronous>, transform_indices = @transform_2, window_bounds = array<i64: 1, 128>}, {pipeline_mode = #tpu.pipeline_mode<synchronous>, transform_indices = @transform_3, window_bounds = array<i64: 128, 256>}, {pipeline_mode = #tpu.pipeline_mode<synchronous>, transform_indices = @transform_4, window_bounds = array<i64: 1, 256>}, {pipeline_mode = #tpu.pipeline_mode<synchronous>, transform_indices = @transform_5, window_bounds = array<i64: 128, 128>}, {pipeline_mode = #tpu.pipeline_mode<synchronous>, transform_indices = @transform_6, window_bounds = array<i64: 1, 128>}, {pipeline_mode = #tpu.pipeline_mode<synchronous>, transform_indices = @transform_7, window_bounds = array<i64: 128, 128>}, {pipeline_mode = #tpu.pipeline_mode<synchronous>, transform_indices = @transform_8, window_bounds = array<i64: 1, 128>}, {transform_indices = @transform_9, window_bounds = array<i64: 8, 256>}]} {
    %c0 = arith.constant 0 : index
    %c0_0 = arith.constant 0 : index
    %0 = vector.load %arg2[%c0, %c0_0] : memref<8x1024xf32, #tpu.memory_space<vmem>>, vector<8x1024xf32>
    %1 = arith.truncf %0 : vector<8x1024xf32> to vector<8x1024xbf16>
    %c0_1 = arith.constant 0 : index
    %c0_2 = arith.constant 0 : index
    %2 = vector.load %arg3[%c0_1, %c0_2] : memref<1024x128xbf16, #tpu.memory_space<vmem>>, vector<1024x128xbf16>
    %cst = arith.constant dense<0.000000e+00> : vector<8x128xf32>
    %3 = tpu.matmul %1, %2, %cst {dimension_numbers = #tpu.dot_dimension_numbers<[1], [0], [0], [1], [0, 0, 1, 1], [], []>} : vector<8x1024xbf16>, vector<1024x128xbf16>, vector<8x128xf32> -> vector<8x128xf32>
    %c0_i32 = arith.constant 0 : i32
    %4 = arith.cmpi eq, %arg1, %c0_i32 : i32
    %5 = arith.extui %4 : i1 to i32
    %c0_i32_3 = arith.constant 0 : i32
    %6 = arith.cmpi ne, %5, %c0_i32_3 : i32
    scf.if %6 {
      %cst_10 = arith.constant 0.000000e+00 : f32
      %13 = vector.broadcast %cst_10 : f32 to vector<8x128xf32>
      %c0_11 = arith.constant 0 : index
      %c0_12 = arith.constant 0 : index
      %14 = vector.load %arg12[%c0_11, %c0_12] : memref<8x128xf32, #tpu.memory_space<vmem>>, vector<8x128xf32>
      tpu.vector_store %arg12[%c0_11, %c0_12], %13 {strides = array<i32>} : memref<8x128xf32, #tpu.memory_space<vmem>>, vector<8x128xf32>,
    } else {
    }
    %c0_4 = arith.constant 0 : index
    %c0_5 = arith.constant 0 : index
    %7 = vector.load %arg12[%c0_4, %c0_5] : memref<8x128xf32, #tpu.memory_space<vmem>>, vector<8x128xf32>
    %8 = arith.addf %7, %3 : vector<8x128xf32>
    %c0_6 = arith.constant 0 : index
    %c0_7 = arith.constant 0 : index
    %9 = vector.load %arg12[%c0_6, %c0_7] : memref<8x128xf32, #tpu.memory_space<vmem>>, vector<8x128xf32>
    tpu.vector_store %arg12[%c0_6, %c0_7], %8 {strides = array<i32>} : memref<8x128xf32, #tpu.memory_space<vmem>>, vector<8x128xf32>,
    %c0_i32_8 = arith.constant 0 : i32
    %10 = arith.cmpi eq, %arg1, %c0_i32_8 : i32
    %11 = arith.extui %10 : i1 to i32
    %c0_i32_9 = arith.constant 0 : i32
    %12 = arith.cmpi ne, %11, %c0_i32_9 : i32
    scf.if %12 {
      %c0_10 = arith.constant 0 : index
      %c0_11 = arith.constant 0 : index
      %13 = vector.load %arg12[%c0_10, %c0_11] : memref<8x128xf32, #tpu.memory_space<vmem>>, vector<8x128xf32>
      %c0_12 = arith.constant 0 : index
      %c0_13 = arith.constant 0 : index
      %14 = vector.load %arg4[%c0_12, %c0_13] : memref<1x128xf32, #tpu.memory_space<vmem>>, vector<1x128xf32>
      %15 = vector.broadcast %14 : vector<1x128xf32> to vector<8x128xf32>
      %16 = arith.addf %13, %15 : vector<8x128xf32>
      %cst_14 = arith.constant 0.000000e+00 : f32
      %17 = vector.broadcast %cst_14 : f32 to vector<8x128xf32>
      %18 = arith.maximumf %16, %17 : vector<8x128xf32>
      %19 = arith.truncf %18 : vector<8x128xf32> to vector<8x128xbf16>
      %c0_15 = arith.constant 0 : index
      %c0_16 = arith.constant 0 : index
      %20 = vector.load %arg5[%c0_15, %c0_16] : memref<128x256xbf16, #tpu.memory_space<vmem>>, vector<128x256xbf16>
      %cst_17 = arith.constant dense<0.000000e+00> : vector<8x256xf32>
      %21 = tpu.matmul %19, %20, %cst_17 {dimension_numbers = #tpu.dot_dimension_numbers<[1], [0], [0], [1], [0, 0, 1, 1], [], []>} : vector<8x128xbf16>, vector<128x256xbf16>, vector<8x256xf32> -> vector<8x256xf32>
      %c0_18 = arith.constant 0 : index
      %c0_19 = arith.constant 0 : index
      %22 = vector.load %arg6[%c0_18, %c0_19] : memref<1x256xf32, #tpu.memory_space<vmem>>, vector<1x256xf32>
      %23 = vector.broadcast %22 : vector<1x256xf32> to vector<8x256xf32>
      %24 = arith.addf %21, %23 : vector<8x256xf32>
      %cst_20 = arith.constant 0.000000e+00 : f32
      %25 = vector.broadcast %cst_20 : f32 to vector<8x256xf32>
      %26 = arith.maximumf %24, %25 : vector<8x256xf32>
      %27 = arith.truncf %26 : vector<8x256xf32> to vector<8x256xbf16>
      %28 = vector.extract_strided_slice %27 {offsets = [0, 0], sizes = [8, 128], strides = [1, 1]} : vector<8x256xbf16> to vector<8x128xbf16>
      %c0_21 = arith.constant 0 : index
      %c0_22 = arith.constant 0 : index
      %29 = vector.load %arg7[%c0_21, %c0_22] : memref<128x128xbf16, #tpu.memory_space<vmem>>, vector<128x128xbf16>
      %cst_23 = arith.constant dense<0.000000e+00> : vector<8x128xf32>
      %30 = tpu.matmul %28, %29, %cst_23 {dimension_numbers = #tpu.dot_dimension_numbers<[1], [0], [0], [1], [0, 0, 1, 1], [], []>} : vector<8x128xbf16>, vector<128x128xbf16>, vector<8x128xf32> -> vector<8x128xf32>
      %c0_24 = arith.constant 0 : index
      %c0_25 = arith.constant 0 : index
      %31 = vector.load %arg8[%c0_24, %c0_25] : memref<1x128xf32, #tpu.memory_space<vmem>>, vector<1x128xf32>
      %32 = vector.broadcast %31 : vector<1x128xf32> to vector<8x128xf32>
      %33 = arith.addf %30, %32 : vector<8x128xf32>
      %34 = vector.extract_strided_slice %27 {offsets = [0, 128], sizes = [8, 128], strides = [1, 1]} : vector<8x256xbf16> to vector<8x128xbf16>
      %c0_26 = arith.constant 0 : index
      %c0_27 = arith.constant 0 : index
      %35 = vector.load %arg9[%c0_26, %c0_27] : memref<128x128xbf16, #tpu.memory_space<vmem>>, vector<128x128xbf16>
      %cst_28 = arith.constant dense<0.000000e+00> : vector<8x128xf32>
      %36 = tpu.matmul %34, %35, %cst_28 {dimension_numbers = #tpu.dot_dimension_numbers<[1], [0], [0], [1], [0, 0, 1, 1], [], []>} : vector<8x128xbf16>, vector<128x128xbf16>, vector<8x128xf32> -> vector<8x128xf32>
      %c0_29 = arith.constant 0 : index
      %c0_30 = arith.constant 0 : index
      %37 = vector.load %arg10[%c0_29, %c0_30] : memref<1x128xf32, #tpu.memory_space<vmem>>, vector<1x128xf32>
      %38 = vector.broadcast %37 : vector<1x128xf32> to vector<8x128xf32>
      %39 = arith.addf %36, %38 : vector<8x128xf32>
      %40 = arith.mulf %33, %33 : vector<8x128xf32>
      %cst_31 = arith.constant dense<0.000000e+00> : vector<8xf32>
      %41 = vector.multi_reduction <add>, %40, %cst_31 [1] : vector<8x128xf32> to vector<8xf32>
      %42 = vector.shape_cast %41 : vector<8xf32> to vector<8x1xf32>
      %cst_32 = arith.constant 1.000000e-24 : f32
      %43 = vector.broadcast %cst_32 : f32 to vector<8x1xf32>
      %44 = arith.maximumf %42, %43 : vector<8x1xf32>
      %45 = math.rsqrt %44 : vector<8x1xf32>
      %46 = vector.broadcast %45 : vector<8x1xf32> to vector<8x128xf32>
      %47 = arith.mulf %33, %46 : vector<8x128xf32>
      %c0_33 = arith.constant 0 : index
      %c0_34 = arith.constant 0 : index
      %48 = vector.load %arg11[%c0_33, %c0_34] : memref<8x256xf32, #tpu.memory_space<vmem>>, vector<8x128xf32>
      tpu.vector_store %arg11[%c0_33, %c0_34], %47 {strides = array<i32>} : memref<8x256xf32, #tpu.memory_space<vmem>>, vector<8x128xf32>,
      %cst_35 = arith.constant dense<0xFF800000> : vector<8xf32>
      %49 = vector.multi_reduction <maximumf>, %39, %cst_35 [1] : vector<8x128xf32> to vector<8xf32>
      %50 = vector.shape_cast %49 : vector<8xf32> to vector<8x1xf32>
      %51 = vector.broadcast %50 : vector<8x1xf32> to vector<8x128xf32>
      %52 = arith.subf %39, %51 : vector<8x128xf32>
      %53 = math.exp %52 : vector<8x128xf32>
      %cst_36 = arith.constant dense<0.000000e+00> : vector<8xf32>
      %54 = vector.multi_reduction <add>, %53, %cst_36 [1] : vector<8x128xf32> to vector<8xf32>
      %55 = vector.shape_cast %54 : vector<8xf32> to vector<8x1xf32>
      %56 = tpu.reciprocal %55 : vector<8x1xf32> -> vector<8x1xf32>
      %57 = vector.broadcast %56 : vector<8x1xf32> to vector<8x128xf32>
      %58 = arith.mulf %53, %57 : vector<8x128xf32>
      %c0_37 = arith.constant 0 : index
      %c128 = arith.constant 128 : index
      %59 = vector.load %arg11[%c0_37, %c128] : memref<8x256xf32, #tpu.memory_space<vmem>>, vector<8x128xf32>
      tpu.vector_store %arg11[%c0_37, %c128], %58 {strides = array<i32>} : memref<8x256xf32, #tpu.memory_space<vmem>>, vector<8x128xf32>,
    } else {
    }
    return
  }
  func.func @transform_0(%arg0: i32, %arg1: i32) -> (i32, i32) {
    %c0_i32 = arith.constant 0 : i32
    return %arg0, %arg1 : i32, i32
  }
  func.func @transform_1(%arg0: i32, %arg1: i32) -> (i32, i32) {
    %c0_i32 = arith.constant 0 : i32
    %c0_i32_0 = arith.constant 0 : i32
    return %arg1, %c0_i32 : i32, i32
  }
  func.func @transform_2(%arg0: i32, %arg1: i32) -> (i32, i32) {
    %c0_i32 = arith.constant 0 : i32
    %c0_i32_0 = arith.constant 0 : i32
    %c0_i32_1 = arith.constant 0 : i32
    return %c0_i32, %c0_i32_0 : i32, i32
  }
  func.func @transform_3(%arg0: i32, %arg1: i32) -> (i32, i32) {
    %c0_i32 = arith.constant 0 : i32
    %c0_i32_0 = arith.constant 0 : i32
    %c0_i32_1 = arith.constant 0 : i32
    return %c0_i32, %c0_i32_0 : i32, i32
  }
  func.func @transform_4(%arg0: i32, %arg1: i32) -> (i32, i32) {
    %c0_i32 = arith.constant 0 : i32
    %c0_i32_0 = arith.constant 0 : i32
    %c0_i32_1 = arith.constant 0 : i32
    return %c0_i32, %c0_i32_0 : i32, i32
  }
  func.func @transform_5(%arg0: i32, %arg1: i32) -> (i32, i32) {
    %c0_i32 = arith.constant 0 : i32
    %c0_i32_0 = arith.constant 0 : i32
    %c0_i32_1 = arith.constant 0 : i32
    return %c0_i32, %c0_i32_0 : i32, i32
  }
  func.func @transform_6(%arg0: i32, %arg1: i32) -> (i32, i32) {
    %c0_i32 = arith.constant 0 : i32
    %c0_i32_0 = arith.constant 0 : i32
    %c0_i32_1 = arith.constant 0 : i32
    return %c0_i32, %c0_i32_0 : i32, i32
  }
  func.func @transform_7(%arg0: i32, %arg1: i32) -> (i32, i32) {
    %c0_i32 = arith.constant 0 : i32
    %c0_i32_0 = arith.constant 0 : i32
    %c0_i32_1 = arith.constant 0 : i32
    return %c0_i32, %c0_i32_0 : i32, i32
  }
  func.func @transform_8(%arg0: i32, %arg1: i32) -> (i32, i32) {
    %c0_i32 = arith.constant 0 : i32
    %c0_i32_0 = arith.constant 0 : i32
    %c0_i32_1 = arith.constant 0 : i32
    return %c0_i32, %c0_i32_0 : i32, i32
  }
  func.func @transform_9(%arg0: i32, %arg1: i32) -> (i32, i32) {
    %c0_i32 = arith.constant 0 : i32
    %c0_i32_0 = arith.constant 0 : i32
    return %arg0, %c0_i32 : i32, i32
  }
}

</mosaic_0001>

<llo_original>
// kernel: _network_forward_impl.1
$region0: #{_network_forward_impl.1}
  #allocation0 [shape = 'u32[]', space=smem, size = 0x4, offset = 0x4, fixed_abs, tag = 'smem constant byte address 0x4 - core index']
  #allocation1 [shape = 'u32[144,128]{1,0:T(1,128)}', space=vmem, size = 0x12000, scoped, tag = 'internal scratch']
  #allocation2 [shape = 'f32[8,128]{1,0:T(8,128)}', space=vmem, size = 0x1000, scoped, tag = 'scratch operand']
  %s0 = inlined_call_operand.vmem [shape: f32[8,1024], index: 0, kind: input, shape index: {}]
  %s1 = inlined_call_operand.vmem [shape: bf16[1024,128], index: 1, kind: input, shape index: {}]
  %s2 = inlined_call_operand.vmem [shape: f32[1,128], index: 2, kind: input, shape index: {}]
  %s3 = inlined_call_operand.vmem [shape: bf16[128,256], index: 3, kind: input, shape index: {}]
  %s4 = inlined_call_operand.vmem [shape: f32[1,256], index: 4, kind: input, shape index: {}]
  %s5 = inlined_call_operand.vmem [shape: bf16[128,128], index: 5, kind: input, shape index: {}]
  %s6 = inlined_call_operand.vmem [shape: f32[1,128], index: 6, kind: input, shape index: {}]
  %s7 = inlined_call_operand.vmem [shape: bf16[128,128], index: 7, kind: input, shape index: {}]
  %s8 = inlined_call_operand.vmem [shape: f32[1,128], index: 8, kind: input, shape index: {}]
  %s9 = inlined_call_operand.vmem [shape: f32[8,256], index: 9, kind: output, shape index: {}]
  %s10 = sld [smem:[#allocation0]]
  $region54: #{_network_forward_impl.1} parent=0
    _
  %s12 = ssub.s32 1, %s10
  %s13 = scalar_select 0, %s12, %s10
  // Predicated region
  $region2: #{_network_forward_impl.1} parent=0 // pred_check
    _
  $region3: #{_network_forward_impl.1} parent=0 // pred_check_branch
    %15 = sbr.rel (0) target = $region5
  $region4: #{_network_forward_impl.1} parent=0 // pred_region
    _
  $region5: #{_network_forward_impl.1} parent=0 // pred_fallthru
    _
  // Predicated region
  $region6: #{_network_forward_impl.1} parent=0 // pred_check
    _
  $region7: #{_network_forward_impl.1} parent=0 // pred_check_branch
    %17 = sbr.rel (0) target = $region9
  $region8: #{_network_forward_impl.1} parent=0 // pred_region
    _
  $region9: #{_network_forward_impl.1} parent=0 // pred_fallthru
    _
  // Predicated region
  $region10: #{_network_forward_impl.1} parent=0 // pred_check
    _
  $region11: #{_network_forward_impl.1} parent=0 // pred_check_branch
    %19 = sbr.rel (0) target = $region13
  $region12: #{_network_forward_impl.1} parent=0 // pred_region
    _
  $region13: #{_network_forward_impl.1} parent=0 // pred_fallthru
    _
  // Predicated region
  $region14: #{_network_forward_impl.1} parent=0 // pred_check
    _
  $region15: #{_network_forward_impl.1} parent=0 // pred_check_branch
    %21 = sbr.rel (0) target = $region17
  $region16: #{_network_forward_impl.1} parent=0 // pred_region
    _
  $region17: #{_network_forward_impl.1} parent=0 // pred_fallthru
    _
  // Predicated region
  $region18: #{_network_forward_impl.1} parent=0 // pred_check
    _
  $region19: #{_network_forward_impl.1} parent=0 // pred_check_branch
    %23 = sbr.rel (0) target = $region21
  $region20: #{_network_forward_impl.1} parent=0 // pred_region
    _
  $region21: #{_network_forward_impl.1} parent=0 // pred_fallthru
    _
  // Predicated region
  $region22: #{_network_forward_impl.1} parent=0 // pred_check
    _
  $region23: #{_network_forward_impl.1} parent=0 // pred_check_branch
    %25 = sbr.rel (0) target = $region25
  $region24: #{_network_forward_impl.1} parent=0 // pred_region
    _
  $region25: #{_network_forward_impl.1} parent=0 // pred_fallthru
    _
  // Predicated region
  $region26: #{_network_forward_impl.1} parent=0 // pred_check
    _
  $region27: #{_network_forward_impl.1} parent=0 // pred_check_branch
    %27 = sbr.rel (0) target = $region29
  $region28: #{_network_forward_impl.1} parent=0 // pred_region
    _
  $region29: #{_network_forward_impl.1} parent=0 // pred_fallthru
    _
  // Predicated region
  $region30: #{_network_forward_impl.1} parent=0 // pred_check
    _
  $region31: #{_network_forward_impl.1} parent=0 // pred_check_branch
    %29 = sbr.rel (0) target = $region33
  $region32: #{_network_forward_impl.1} parent=0 // pred_region
    _
  $region33: #{_network_forward_impl.1} parent=0 // pred_fallthru
    _
  // Predicated region
  $region34: #{_network_forward_impl.1} parent=0 // pred_check
    _
  $region35: #{_network_forward_impl.1} parent=0 // pred_check_branch
    %31 = sbr.rel (0) target = $region37
  $region36: #{_network_forward_impl.1} parent=0 // pred_region
    _
  $region37: #{_network_forward_impl.1} parent=0 // pred_fallthru
    _
  %v33 = vld [vmem:[%s0] sm:$0xff]
  %v34 = vld [vmem:[%s0 + $0x8] sm:$0xff]
  %v35 = vld [vmem:[%s0 + $0x10] sm:$0xff]
  %v36 = vld [vmem:[%s0 + $0x18] sm:$0xff]
  %v37 = vld [vmem:[%s0 + $0x20] sm:$0xff]
  %v38 = vld [vmem:[%s0 + $0x28] sm:$0xff]
  %v39 = vld [vmem:[%s0 + $0x30] sm:$0xff]
  %v40 = vld [vmem:[%s0 + $0x38] sm:$0xff]
  %v41 = vpack.c.bf16 %v33, %v33
  %v42 = vpack.c.bf16 %v34, %v34
  %v43 = vpack.c.bf16 %v35, %v35
  %v44 = vpack.c.bf16 %v36, %v36
  %v45 = vpack.c.bf16 %v37, %v37
  %v46 = vpack.c.bf16 %v38, %v38
  %v47 = vpack.c.bf16 %v39, %v39
  %v48 = vpack.c.bf16 %v40, %v40
  %v49 = vld [vmem:[%s1] sm:$0xf]
  %v50 = vld [vmem:[%s1 + $0x4] sm:$0xf]
  %v51 = vld [vmem:[%s1 + $0x8] sm:$0xf]
  %v52 = vld [vmem:[%s1 + $0xc] sm:$0xf]
  %v53 = vld [vmem:[%s1 + $0x10] sm:$0xf]
  %v54 = vld [vmem:[%s1 + $0x14] sm:$0xf]
  %v55 = vld [vmem:[%s1 + $0x18] sm:$0xf]
  %v56 = vld [vmem:[%s1 + $0x1c] sm:$0xf]
  %v57 = vld [vmem:[%s1 + $0x20] sm:$0xf]
  %v58 = vld [vmem:[%s1 + $0x24] sm:$0xf]
  %v59 = vld [vmem:[%s1 + $0x28] sm:$0xf]
  %v60 = vld [vmem:[%s1 + $0x2c] sm:$0xf]
  %v61 = vld [vmem:[%s1 + $0x30] sm:$0xf]
  %v62 = vld [vmem:[%s1 + $0x34] sm:$0xf]
  %v63 = vld [vmem:[%s1 + $0x38] sm:$0xf]
  %v64 = vld [vmem:[%s1 + $0x3c] sm:$0xf]
  %v65 = vld [vmem:[%s1 + $0x40] sm:$0xf]
  %v66 = vld [vmem:[%s1 + $0x44] sm:$0xf]
  %v67 = vld [vmem:[%s1 + $0x48] sm:$0xf]
  %v68 = vld [vmem:[%s1 + $0x4c] sm:$0xf]
  %v69 = vld [vmem:[%s1 + $0x50] sm:$0xf]
  %v70 = vld [vmem:[%s1 + $0x54] sm:$0xf]
  %v71 = vld [vmem:[%s1 + $0x58] sm:$0xf]
  %v72 = vld [vmem:[%s1 + $0x5c] sm:$0xf]
  %v73 = vld [vmem:[%s1 + $0x60] sm:$0xf]
  %v74 = vld [vmem:[%s1 + $0x64] sm:$0xf]
  %v75 = vld [vmem:[%s1 + $0x68] sm:$0xf]
  %v76 = vld [vmem:[%s1 + $0x6c] sm:$0xf]
  %v77 = vld [vmem:[%s1 + $0x70] sm:$0xf]
  %v78 = vld [vmem:[%s1 + $0x74] sm:$0xf]
  %v79 = vld [vmem:[%s1 + $0x78] sm:$0xf]
  %v80 = vld [vmem:[%s1 + $0x7c] sm:$0xf]
  %v81 = vld [vmem:[%s1 + $0x80] sm:$0xf]
  %v82 = vld [vmem:[%s1 + $0x84] sm:$0xf]
  %v83 = vld [vmem:[%s1 + $0x88] sm:$0xf]
  %v84 = vld [vmem:[%s1 + $0x8c] sm:$0xf]
  %v85 = vld [vmem:[%s1 + $0x90] sm:$0xf]
  %v86 = vld [vmem:[%s1 + $0x94] sm:$0xf]
  %v87 = vld [vmem:[%s1 + $0x98] sm:$0xf]
  %v88 = vld [vmem:[%s1 + $0x9c] sm:$0xf]
  %v89 = vld [vmem:[%s1 + $0xa0] sm:$0xf]
  %v90 = vld [vmem:[%s1 + $0xa4] sm:$0xf]
  %v91 = vld [vmem:[%s1 + $0xa8] sm:$0xf]
  %v92 = vld [vmem:[%s1 + $0xac] sm:$0xf]
  %v93 = vld [vmem:[%s1 + $0xb0] sm:$0xf]
  %v94 = vld [vmem:[%s1 + $0xb4] sm:$0xf]
  %v95 = vld [vmem:[%s1 + $0xb8] sm:$0xf]
  %v96 = vld [vmem:[%s1 + $0xbc] sm:$0xf]
  %v97 = vld [vmem:[%s1 + $0xc0] sm:$0xf]
  %v98 = vld [vmem:[%s1 + $0xc4] sm:$0xf]
  %v99 = vld [vmem:[%s1 + $0xc8] sm:$0xf]
  %v100 = vld [vmem:[%s1 + $0xcc] sm:$0xf]
  %v101 = vld [vmem:[%s1 + $0xd0] sm:$0xf]
  %v102 = vld [vmem:[%s1 + $0xd4] sm:$0xf]
  %v103 = vld [vmem:[%s1 + $0xd8] sm:$0xf]
  %v104 = vld [vmem:[%s1 + $0xdc] sm:$0xf]
  %v105 = vld [vmem:[%s1 + $0xe0] sm:$0xf]
  %v106 = vld [vmem:[%s1 + $0xe4] sm:$0xf]
  %v107 = vld [vmem:[%s1 + $0xe8] sm:$0xf]
  %v108 = vld [vmem:[%s1 + $0xec] sm:$0xf]
  %v109 = vld [vmem:[%s1 + $0xf0] sm:$0xf]
  %v110 = vld [vmem:[%s1 + $0xf4] sm:$0xf]
  %v111 = vld [vmem:[%s1 + $0xf8] sm:$0xf]
  %v112 = vld [vmem:[%s1 + $0xfc] sm:$0xf]
  %v113 = vld [vmem:[%s1 + $0x100] sm:$0xf]
  %v114 = vld [vmem:[%s1 + $0x104] sm:$0xf]
  %v115 = vld [vmem:[%s1 + $0x108] sm:$0xf]
  %v116 = vld [vmem:[%s1 + $0x10c] sm:$0xf]
  %v117 = vld [vmem:[%s1 + $0x110] sm:$0xf]
  %v118 = vld [vmem:[%s1 + $0x114] sm:$0xf]
  %v119 = vld [vmem:[%s1 + $0x118] sm:$0xf]
  %v120 = vld [vmem:[%s1 + $0x11c] sm:$0xf]
  %v121 = vld [vmem:[%s1 + $0x120] sm:$0xf]
  %v122 = vld [vmem:[%s1 + $0x124] sm:$0xf]
  %v123 = vld [vmem:[%s1 + $0x128] sm:$0xf]
  %v124 = vld [vmem:[%s1 + $0x12c] sm:$0xf]
  %v125 = vld [vmem:[%s1 + $0x130] sm:$0xf]
  %v126 = vld [vmem:[%s1 + $0x134] sm:$0xf]
  %v127 = vld [vmem:[%s1 + $0x138] sm:$0xf]
  %v128 = vld [vmem:[%s1 + $0x13c] sm:$0xf]
  %v129 = vld [vmem:[%s1 + $0x140] sm:$0xf]
  %v130 = vld [vmem:[%s1 + $0x144] sm:$0xf]
  %v131 = vld [vmem:[%s1 + $0x148] sm:$0xf]
  %v132 = vld [vmem:[%s1 + $0x14c] sm:$0xf]
  %v133 = vld [vmem:[%s1 + $0x150] sm:$0xf]
  %v134 = vld [vmem:[%s1 + $0x154] sm:$0xf]
  %v135 = vld [vmem:[%s1 + $0x158] sm:$0xf]
  %v136 = vld [vmem:[%s1 + $0x15c] sm:$0xf]
  %v137 = vld [vmem:[%s1 + $0x160] sm:$0xf]
  %v138 = vld [vmem:[%s1 + $0x164] sm:$0xf]
  %v139 = vld [vmem:[%s1 + $0x168] sm:$0xf]
  %v140 = vld [vmem:[%s1 + $0x16c] sm:$0xf]
  %v141 = vld [vmem:[%s1 + $0x170] sm:$0xf]
  %v142 = vld [vmem:[%s1 + $0x174] sm:$0xf]
  %v143 = vld [vmem:[%s1 + $0x178] sm:$0xf]
  %v144 = vld [vmem:[%s1 + $0x17c] sm:$0xf]
  %v145 = vld [vmem:[%s1 + $0x180] sm:$0xf]
  %v146 = vld [vmem:[%s1 + $0x184] sm:$0xf]
  %v147 = vld [vmem:[%s1 + $0x188] sm:$0xf]
  %v148 = vld [vmem:[%s1 + $0x18c] sm:$0xf]
  %v149 = vld [vmem:[%s1 + $0x190] sm:$0xf]
  %v150 = vld [vmem:[%s1 + $0x194] sm:$0xf]
  %v151 = vld [vmem:[%s1 + $0x198] sm:$0xf]
  %v152 = vld [vmem:[%s1 + $0x19c] sm:$0xf]
  %v153 = vld [vmem:[%s1 + $0x1a0] sm:$0xf]
  %v154 = vld [vmem:[%s1 + $0x1a4] sm:$0xf]
  %v155 = vld [vmem:[%s1 + $0x1a8] sm:$0xf]
  %v156 = vld [vmem:[%s1 + $0x1ac] sm:$0xf]
  %v157 = vld [vmem:[%s1 + $0x1b0] sm:$0xf]
  %v158 = vld [vmem:[%s1 + $0x1b4] sm:$0xf]
  %v159 = vld [vmem:[%s1 + $0x1b8] sm:$0xf]
  %v160 = vld [vmem:[%s1 + $0x1bc] sm:$0xf]
  %v161 = vld [vmem:[%s1 + $0x1c0] sm:$0xf]
  %v162 = vld [vmem:[%s1 + $0x1c4] sm:$0xf]
  %v163 = vld [vmem:[%s1 + $0x1c8] sm:$0xf]
  %v164 = vld [vmem:[%s1 + $0x1cc] sm:$0xf]
  %v165 = vld [vmem:[%s1 + $0x1d0] sm:$0xf]
  %v166 = vld [vmem:[%s1 + $0x1d4] sm:$0xf]
  %v167 = vld [vmem:[%s1 + $0x1d8] sm:$0xf]
  %v168 = vld [vmem:[%s1 + $0x1dc] sm:$0xf]
  %v169 = vld [vmem:[%s1 + $0x1e0] sm:$0xf]
  %v170 = vld [vmem:[%s1 + $0x1e4] sm:$0xf]
  %v171 = vld [vmem:[%s1 + $0x1e8] sm:$0xf]
  %v172 = vld [vmem:[%s1 + $0x1ec] sm:$0xf]
  %v173 = vld [vmem:[%s1 + $0x1f0] sm:$0xf]
  %v174 = vld [vmem:[%s1 + $0x1f4] sm:$0xf]
  %v175 = vld [vmem:[%s1 + $0x1f8] sm:$0xf]
  %v176 = vld [vmem:[%s1 + $0x1fc] sm:$0xf]
  %v305 = vunpack.c.l.b16 %v49
  %v306 = vunpack.c.l.b16 %v50
  %v307 = vunpack.c.l.b16 %v51
  %v308 = vunpack.c.l.b16 %v52
  %v309 = vunpack.c.l.b16 %v53
  %v310 = vunpack.c.l.b16 %v54
  %v311 = vunpack.c.l.b16 %v55
  %v312 = vunpack.c.l.b16 %v56
  %v313 = vunpack.c.l.b16 %v57
  %v314 = vunpack.c.l.b16 %v58
  %v315 = vunpack.c.l.b16 %v59
  %v316 = vunpack.c.l.b16 %v60
  %v317 = vunpack.c.l.b16 %v61
  %v318 = vunpack.c.l.b16 %v62
  %v319 = vunpack.c.l.b16 %v63
  %v320 = vunpack.c.l.b16 %v64
  %v321 = vunpack.c.l.b16 %v65
  %v322 = vunpack.c.l.b16 %v66
  %v323 = vunpack.c.l.b16 %v67
  %v324 = vunpack.c.l.b16 %v68
  %v325 = vunpack.c.l.b16 %v69
  %v326 = vunpack.c.l.b16 %v70
  %v327 = vunpack.c.l.b16 %v71
  %v328 = vunpack.c.l.b16 %v72
  %v329 = vunpack.c.l.b16 %v73
  %v330 = vunpack.c.l.b16 %v74
  %v331 = vunpack.c.l.b16 %v75
  %v332 = vunpack.c.l.b16 %v76
  %v333 = vunpack.c.l.b16 %v77
  %v334 = vunpack.c.l.b16 %v78
  %v335 = vunpack.c.l.b16 %v79
  %v336 = vunpack.c.l.b16 %v80
  %v337 = vunpack.c.l.b16 %v81
  %v338 = vunpack.c.l.b16 %v82
  %v339 = vunpack.c.l.b16 %v83
  %v340 = vunpack.c.l.b16 %v84
  %v341 = vunpack.c.l.b16 %v85
  %v342 = vunpack.c.l.b16 %v86
  %v343 = vunpack.c.l.b16 %v87
  %v344 = vunpack.c.l.b16 %v88
  %v345 = vunpack.c.l.b16 %v89
  %v346 = vunpack.c.l.b16 %v90
  %v347 = vunpack.c.l.b16 %v91
  %v348 = vunpack.c.l.b16 %v92
  %v349 = vunpack.c.l.b16 %v93
  %v350 = vunpack.c.l.b16 %v94
  %v351 = vunpack.c.l.b16 %v95
  %v352 = vunpack.c.l.b16 %v96
  %v353 = vunpack.c.l.b16 %v97
  %v354 = vunpack.c.l.b16 %v98
  %v355 = vunpack.c.l.b16 %v99
  %v356 = vunpack.c.l.b16 %v100
  %v357 = vunpack.c.l.b16 %v101
  %v358 = vunpack.c.l.b16 %v102
  %v359 = vunpack.c.l.b16 %v103
  %v360 = vunpack.c.l.b16 %v104
  %v361 = vunpack.c.l.b16 %v105
  %v362 = vunpack.c.l.b16 %v106
  %v363 = vunpack.c.l.b16 %v107
  %v364 = vunpack.c.l.b16 %v108
  %v365 = vunpack.c.l.b16 %v109
  %v366 = vunpack.c.l.b16 %v110
  %v367 = vunpack.c.l.b16 %v111
  %v368 = vunpack.c.l.b16 %v112
  %v369 = vunpack.c.l.b16 %v113
  %v370 = vunpack.c.l.b16 %v114
  %v371 = vunpack.c.l.b16 %v115
  %v372 = vunpack.c.l.b16 %v116
  %v373 = vunpack.c.l.b16 %v117
  %v374 = vunpack.c.l.b16 %v118
  %v375 = vunpack.c.l.b16 %v119
  %v376 = vunpack.c.l.b16 %v120
  %v377 = vunpack.c.l.b16 %v121
  %v378 = vunpack.c.l.b16 %v122
  %v379 = vunpack.c.l.b16 %v123
  %v380 = vunpack.c.l.b16 %v124
  %v381 = vunpack.c.l.b16 %v125
  %v382 = vunpack.c.l.b16 %v126
  %v383 = vunpack.c.l.b16 %v127
  %v384 = vunpack.c.l.b16 %v128
  %v385 = vunpack.c.l.b16 %v129
  %v386 = vunpack.c.l.b16 %v130
  %v387 = vunpack.c.l.b16 %v131
  %v388 = vunpack.c.l.b16 %v132
  %v389 = vunpack.c.l.b16 %v133
  %v390 = vunpack.c.l.b16 %v134
  %v391 = vunpack.c.l.b16 %v135
  %v392 = vunpack.c.l.b16 %v136
  %v393 = vunpack.c.l.b16 %v137
  %v394 = vunpack.c.l.b16 %v138
  %v395 = vunpack.c.l.b16 %v139
  %v396 = vunpack.c.l.b16 %v140
  %v397 = vunpack.c.l.b16 %v141
  %v398 = vunpack.c.l.b16 %v142
  %v399 = vunpack.c.l.b16 %v143
  %v400 = vunpack.c.l.b16 %v144
  %v401 = vunpack.c.l.b16 %v145
  %v402 = vunpack.c.l.b16 %v146
  %v403 = vunpack.c.l.b16 %v147
  %v404 = vunpack.c.l.b16 %v148
  %v405 = vunpack.c.l.b16 %v149
  %v406 = vunpack.c.l.b16 %v150
  %v407 = vunpack.c.l.b16 %v151
  %v408 = vunpack.c.l.b16 %v152
  %v409 = vunpack.c.l.b16 %v153
  %v410 = vunpack.c.l.b16 %v154
  %v411 = vunpack.c.l.b16 %v155
  %v412 = vunpack.c.l.b16 %v156
  %v413 = vunpack.c.l.b16 %v157
  %v414 = vunpack.c.l.b16 %v158
  %v415 = vunpack.c.l.b16 %v159
  %v416 = vunpack.c.l.b16 %v160
  %v417 = vunpack.c.l.b16 %v161
  %v418 = vunpack.c.l.b16 %v162
  %v419 = vunpack.c.l.b16 %v163
  %v420 = vunpack.c.l.b16 %v164
  %v421 = vunpack.c.l.b16 %v165
  %v422 = vunpack.c.l.b16 %v166
  %v423 = vunpack.c.l.b16 %v167
  %v424 = vunpack.c.l.b16 %v168
  %v425 = vunpack.c.l.b16 %v169
  %v426 = vunpack.c.l.b16 %v170
  %v427 = vunpack.c.l.b16 %v171
  %v428 = vunpack.c.l.b16 %v172
  %v429 = vunpack.c.l.b16 %v173
  %v430 = vunpack.c.l.b16 %v174
  %v431 = vunpack.c.l.b16 %v175
  %v432 = vunpack.c.l.b16 %v176
  %v433 = vpack.c.b16 %v306, %v305
  %v434 = vpack.c.b16 %v308, %v307
  %v435 = vpack.c.b16 %v310, %v309
  %v436 = vpack.c.b16 %v312, %v311
  %v437 = vpack.c.b16 %v314, %v313
  %v438 = vpack.c.b16 %v316, %v315
  %v439 = vpack.c.b16 %v318, %v317
  %v440 = vpack.c.b16 %v320, %v319
  %v441 = vpack.c.b16 %v322, %v321
  %v442 = vpack.c.b16 %v324, %v323
  %v443 = vpack.c.b16 %v326, %v325
  %v444 = vpack.c.b16 %v328, %v327
  %v445 = vpack.c.b16 %v330, %v329
  %v446 = vpack.c.b16 %v332, %v331
  %v447 = vpack.c.b16 %v334, %v333
  %v448 = vpack.c.b16 %v336, %v335
  %v449 = vpack.c.b16 %v338, %v337
  %v450 = vpack.c.b16 %v340, %v339
  %v451 = vpack.c.b16 %v342, %v341
  %v452 = vpack.c.b16 %v344, %v343
  %v453 = vpack.c.b16 %v346, %v345
  %v454 = vpack.c.b16 %v348, %v347
  %v455 = vpack.c.b16 %v350, %v349
  %v456 = vpack.c.b16 %v352, %v351
  %v457 = vpack.c.b16 %v354, %v353
  %v458 = vpack.c.b16 %v356, %v355
  %v459 = vpack.c.b16 %v358, %v357
  %v460 = vpack.c.b16 %v360, %v359
  %v461 = vpack.c.b16 %v362, %v361
  %v462 = vpack.c.b16 %v364, %v363
  %v463 = vpack.c.b16 %v366, %v365
  %v464 = vpack.c.b16 %v368, %v367
  %v465 = vpack.c.b16 %v370, %v369
  %v466 = vpack.c.b16 %v372, %v371
  %v467 = vpack.c.b16 %v374, %v373
  %v468 = vpack.c.b16 %v376, %v375
  %v469 = vpack.c.b16 %v378, %v377
  %v470 = vpack.c.b16 %v380, %v379
  %v471 = vpack.c.b16 %v382, %v381
  %v472 = vpack.c.b16 %v384, %v383
  %v473 = vpack.c.b16 %v386, %v385
  %v474 = vpack.c.b16 %v388, %v387
  %v475 = vpack.c.b16 %v390, %v389
  %v476 = vpack.c.b16 %v392, %v391
  %v477 = vpack.c.b16 %v394, %v393
  %v478 = vpack.c.b16 %v396, %v395
  %v479 = vpack.c.b16 %v398, %v397
  %v480 = vpack.c.b16 %v400, %v399
  %v481 = vpack.c.b16 %v402, %v401
  %v482 = vpack.c.b16 %v404, %v403
  %v483 = vpack.c.b16 %v406, %v405
  %v484 = vpack.c.b16 %v408, %v407
  %v485 = vpack.c.b16 %v410, %v409
  %v486 = vpack.c.b16 %v412, %v411
  %v487 = vpack.c.b16 %v414, %v413
  %v488 = vpack.c.b16 %v416, %v415
  %v489 = vpack.c.b16 %v418, %v417
  %v490 = vpack.c.b16 %v420, %v419
  %v491 = vpack.c.b16 %v422, %v421
  %v492 = vpack.c.b16 %v424, %v423
  %v493 = vpack.c.b16 %v426, %v425
  %v494 = vpack.c.b16 %v428, %v427
  %v495 = vpack.c.b16 %v430, %v429
  %v496 = vpack.c.b16 %v432, %v431
  %561 = vmatprep.subr.bf16.mxu0 0
  %562 = vmatpush1.bf16.msra.mxu0 %v433
  %563 = vmatprep.subr.bf16.mxu0 0
  %564 = vmatpush1.bf16.msra.mxu0 %v434
  %565 = vmatprep.subr.bf16.mxu0 0
  %566 = vmatpush1.bf16.msra.mxu0 %v435
  %567 = vmatprep.subr.bf16.mxu0 0
  %568 = vmatpush1.bf16.msra.mxu0 %v436
  %569 = vmatprep.subr.bf16.mxu0 0
  %570 = vmatpush1.bf16.msra.mxu0 %v437
  %571 = vmatprep.subr.bf16.mxu0 0
  %572 = vmatpush1.bf16.msra.mxu0 %v438
  %573 = vmatprep.subr.bf16.mxu0 0
  %574 = vmatpush1.bf16.msra.mxu0 %v439
  %575 = vmatprep.subr.bf16.mxu0 0
  %576 = vmatpush1.bf16.msra.mxu0 %v440
  %577 = vmatprep.subr.bf16.mxu0 0
  %578 = vmatpush1.bf16.msra.mxu0 %v441
  %579 = vmatprep.subr.bf16.mxu0 0
  %580 = vmatpush1.bf16.msra.mxu0 %v442
  %581 = vmatprep.subr.bf16.mxu0 0
  %582 = vmatpush1.bf16.msra.mxu0 %v443
  %583 = vmatprep.subr.bf16.mxu0 0
  %584 = vmatpush1.bf16.msra.mxu0 %v444
  %585 = vmatprep.subr.bf16.mxu0 0
  %586 = vmatpush1.bf16.msra.mxu0 %v445
  %587 = vmatprep.subr.bf16.mxu0 0
  %588 = vmatpush1.bf16.msra.mxu0 %v446
  %589 = vmatprep.subr.bf16.mxu0 0
  %590 = vmatpush1.bf16.msra.mxu0 %v447
  %591 = vmatprep.subr.bf16.mxu0 0
  %592 = vmatpush1.bf16.msra.mxu0 %v448
  %593 = vmatprep.mubr.bf16.mxu0 %v42
  %594 = vmatmul.mubr.bf16.gmra.mrb[0].mxu0 %v41
  %v595 = vpop.f32.mrb[0].mxu0
  %v596 = vadd.f32 0.0, %v595
  %v597 = vpop.f32.mrb[0].mxu0
  %v598 = vpop.f32.mrb[0].mxu0
  %v599 = vpop.f32.mrb[0].mxu0
  %600 = vdwg.mxu0
  %601 = vmatprep.subr.bf16.mxu0 0
  %602 = vmatpush1.bf16.msra.mxu0 %v449
  %603 = vmatprep.subr.bf16.mxu0 0
  %604 = vmatpush1.bf16.msra.mxu0 %v450
  %605 = vmatprep.subr.bf16.mxu0 0
  %606 = vmatpush1.bf16.msra.mxu0 %v451
  %607 = vmatprep.subr.bf16.mxu0 0
  %608 = vmatpush1.bf16.msra.mxu0 %v452
  %609 = vmatprep.subr.bf16.mxu0 0
  %610 = vmatpush1.bf16.msra.mxu0 %v453
  %611 = vmatprep.subr.bf16.mxu0 0
  %612 = vmatpush1.bf16.msra.mxu0 %v454
  %613 = vmatprep.subr.bf16.mxu0 0
  %614 = vmatpush1.bf16.msra.mxu0 %v455
  %615 = vmatprep.subr.bf16.mxu0 0
  %616 = vmatpush1.bf16.msra.mxu0 %v456
  %617 = vmatprep.subr.bf16.mxu0 0
  %618 = vmatpush1.bf16.msra.mxu0 %v457
  %619 = vmatprep.subr.bf16.mxu0 0
  %620 = vmatpush1.bf16.msra.mxu0 %v458
  %621 = vmatprep.subr.bf16.mxu0 0
  %622 = vmatpush1.bf16.msra.mxu0 %v459
  %623 = vmatprep.subr.bf16.mxu0 0
  %624 = vmatpush1.bf16.msra.mxu0 %v460
  %625 = vmatprep.subr.bf16.mxu0 0
  %626 = vmatpush1.bf16.msra.mxu0 %v461
  %627 = vmatprep.subr.bf16.mxu0 0
  %628 = vmatpush1.bf16.msra.mxu0 %v462
  %629 = vmatprep.subr.bf16.mxu0 0
  %630 = vmatpush1.bf16.msra.mxu0 %v463
  %631 = vmatprep.subr.bf16.mxu0 0
  %632 = vmatpush1.bf16.msra.mxu0 %v464
  %633 = vmatprep.mubr.bf16.mxu0 %v44
  %634 = vmatmul.mubr.bf16.gmra.mrb[0].mxu0 %v43
  %v635 = vpop.f32.mrb[0].mxu0
  %v636 = vadd.f32 %v596, %v635
  %v637 = vpop.f32.mrb[0].mxu0
  %v638 = vpop.f32.mrb[0].mxu0
  %v639 = vpop.f32.mrb[0].mxu0
  %640 = vdwg.mxu0
  %641 = vmatprep.subr.bf16.mxu0 0
  %642 = vmatpush1.bf16.msra.mxu0 %v465
  %643 = vmatprep.subr.bf16.mxu0 0
  %644 = vmatpush1.bf16.msra.mxu0 %v466
  %645 = vmatprep.subr.bf16.mxu0 0
  %646 = vmatpush1.bf16.msra.mxu0 %v467
  %647 = vmatprep.subr.bf16.mxu0 0
  %648 = vmatpush1.bf16.msra.mxu0 %v468
  %649 = vmatprep.subr.bf16.mxu0 0
  %650 = vmatpush1.bf16.msra.mxu0 %v469
  %651 = vmatprep.subr.bf16.mxu0 0
  %652 = vmatpush1.bf16.msra.mxu0 %v470
  %653 = vmatprep.subr.bf16.mxu0 0
  %654 = vmatpush1.bf16.msra.mxu0 %v471
  %655 = vmatprep.subr.bf16.mxu0 0
  %656 = vmatpush1.bf16.msra.mxu0 %v472
  %657 = vmatprep.subr.bf16.mxu0 0
  %658 = vmatpush1.bf16.msra.mxu0 %v473
  %659 = vmatprep.subr.bf16.mxu0 0
  %660 = vmatpush1.bf16.msra.mxu0 %v474
  %661 = vmatprep.subr.bf16.mxu0 0
  %662 = vmatpush1.bf16.msra.mxu0 %v475
  %663 = vmatprep.subr.bf16.mxu0 0
  %664 = vmatpush1.bf16.msra.mxu0 %v476
  %665 = vmatprep.subr.bf16.mxu0 0
  %666 = vmatpush1.bf16.msra.mxu0 %v477
  %667 = vmatprep.subr.bf16.mxu0 0
  %668 = vmatpush1.bf16.msra.mxu0 %v478
  %669 = vmatprep.subr.bf16.mxu0 0
  %670 = vmatpush1.bf16.msra.mxu0 %v479
  %671 = vmatprep.subr.bf16.mxu0 0
  %672 = vmatpush1.bf16.msra.mxu0 %v480
  %673 = vmatprep.mubr.bf16.mxu0 %v46
  %674 = vmatmul.mubr.bf16.gmra.mrb[0].mxu0 %v45
  %v675 = vpop.f32.mrb[0].mxu0
  %v676 = vadd.f32 %v636, %v675
  %v677 = vpop.f32.mrb[0].mxu0
  %v678 = vpop.f32.mrb[0].mxu0
  %v679 = vpop.f32.mrb[0].mxu0
  %680 = vdwg.mxu0
  %681 = vmatprep.subr.bf16.mxu0 0
  %682 = vmatpush1.bf16.msra.mxu0 %v481
  %683 = vmatprep.subr.bf16.mxu0 0
  %684 = vmatpush1.bf16.msra.mxu0 %v482
  %685 = vmatprep.subr.bf16.mxu0 0
  %686 = vmatpush1.bf16.msra.mxu0 %v483
  %687 = vmatprep.subr.bf16.mxu0 0
  %688 = vmatpush1.bf16.msra.mxu0 %v484
  %689 = vmatprep.subr.bf16.mxu0 0
  %690 = vmatpush1.bf16.msra.mxu0 %v485
  %691 = vmatprep.subr.bf16.mxu0 0
  %692 = vmatpush1.bf16.msra.mxu0 %v486
  %693 = vmatprep.subr.bf16.mxu0 0
  %694 = vmatpush1.bf16.msra.mxu0 %v487
  %695 = vmatprep.subr.bf16.mxu0 0
  %696 = vmatpush1.bf16.msra.mxu0 %v488
  %697 = vmatprep.subr.bf16.mxu0 0
  %698 = vmatpush1.bf16.msra.mxu0 %v489
  %699 = vmatprep.subr.bf16.mxu0 0
  %700 = vmatpush1.bf16.msra.mxu0 %v490
  %701 = vmatprep.subr.bf16.mxu0 0
  %702 = vmatpush1.bf16.msra.mxu0 %v491
  %703 = vmatprep.subr.bf16.mxu0 0
  %704 = vmatpush1.bf16.msra.mxu0 %v492
  %705 = vmatprep.subr.bf16.mxu0 0
  %706 = vmatpush1.bf16.msra.mxu0 %v493
  %707 = vmatprep.subr.bf16.mxu0 0
  %708 = vmatpush1.bf16.msra.mxu0 %v494
  %709 = vmatprep.subr.bf16.mxu0 0
  %710 = vmatpush1.bf16.msra.mxu0 %v495
  %711 = vmatprep.subr.bf16.mxu0 0
  %712 = vmatpush1.bf16.msra.mxu0 %v496
  %713 = vmatprep.mubr.bf16.mxu0 %v48
  %714 = vmatmul.mubr.bf16.gmra.mrb[0].mxu0 %v47
  %v715 = vpop.f32.mrb[0].mxu0
  %v716 = vadd.f32 %v676, %v715
  %v717 = vpop.f32.mrb[0].mxu0
  %v718 = vpop.f32.mrb[0].mxu0
  %v719 = vpop.f32.mrb[0].mxu0
  %720 = vdwg.mxu0
  %p721 = scmp.eq.s32.totalorder 0, 0
  // Predicated region
  $region38: #{_network_forward_impl.1} parent=0 // pred_check
    %p722 = pneg %p721
  $region39: #{_network_forward_impl.1} parent=0 // pred_check_branch
    %724 = sbr.rel (%p722) target = $region41
  $region40: #{_network_forward_impl.1} parent=0 // pred_region
    %725 = vst [vmem:[#allocation2] sm:$0xff] 0.0
  $region41: #{_network_forward_impl.1} parent=0 // pred_fallthru
    _
  %v726 = vld [vmem:[#allocation2] sm:$0xff]
  %v727 = vadd.f32 %v726, %v716
  %728 = vst [vmem:[#allocation2] sm:$0xff] %v727
  // Predicated region
  $region42: #{_network_forward_impl.1} parent=0 // pred_check
    %p729 = pneg %p721
  $region43: #{_network_forward_impl.1} parent=0 // pred_check_branch
    %731 = sbr.rel (%p729) target = $region45
  $region44: #{_network_forward_impl.1} parent=0 // pred_region
    %v732 = vld [vmem:[#allocation2] sm:$0xff]
    %v733 = vld [vmem:[%s2] sm:$0x1]
    %v735 = vlaneseq
    %v736 = vshrl.u32 %v735, 7
    %v737 = vsub.s32 0, %v736
    %v738 = vrot.slane %v733, %v737
    %v740 = vadd.f32 %v732, %v738
    %v741 = vmax.f32 %v740, 0.0
    %v742 = vpack.c.bf16 %v741, %v741
    %v743 = vld [vmem:[%s3] sm:$0xff]
    %v744 = vld [vmem:[%s3 + $0x8] sm:$0xff]
    %v745 = vld [vmem:[%s3 + $0x10] sm:$0xff]
    %v746 = vld [vmem:[%s3 + $0x18] sm:$0xff]
    %v747 = vld [vmem:[%s3 + $0x20] sm:$0xff]
    %v748 = vld [vmem:[%s3 + $0x28] sm:$0xff]
    %v749 = vld [vmem:[%s3 + $0x30] sm:$0xff]
    %v750 = vld [vmem:[%s3 + $0x38] sm:$0xff]
    %v751 = vld [vmem:[%s3 + $0x40] sm:$0xff]
    %v752 = vld [vmem:[%s3 + $0x48] sm:$0xff]
    %v753 = vld [vmem:[%s3 + $0x50] sm:$0xff]
    %v754 = vld [vmem:[%s3 + $0x58] sm:$0xff]
    %v755 = vld [vmem:[%s3 + $0x60] sm:$0xff]
    %v756 = vld [vmem:[%s3 + $0x68] sm:$0xff]
    %v757 = vld [vmem:[%s3 + $0x70] sm:$0xff]
    %v758 = vld [vmem:[%s3 + $0x78] sm:$0xff]
    %v759 = vld [vmem:[%s4] sm:$0x3]
    %v761 = vlaneseq
    %v762 = vshrl.u32 %v761, 7
    %v763 = vsub.s32 0, %v762
    %v764 = vrot.slane %v759, %v763
    %v765 = vlaneseq
    %v766 = vshrl.u32 %v765, 7
    %v767 = vsub.s32 1, %v766
    %v768 = vrot.slane %v759, %v767
    %v787 = vunpack.c.l.b16 %v743
    %v788 = vunpack.c.h.b16 %v743
    %v789 = vunpack.c.l.b16 %v744
    %v790 = vunpack.c.h.b16 %v744
    %v791 = vunpack.c.l.b16 %v745
    %v792 = vunpack.c.h.b16 %v745
    %v793 = vunpack.c.l.b16 %v746
    %v794 = vunpack.c.h.b16 %v746
    %v795 = vunpack.c.l.b16 %v747
    %v796 = vunpack.c.h.b16 %v747
    %v797 = vunpack.c.l.b16 %v748
    %v798 = vunpack.c.h.b16 %v748
    %v799 = vunpack.c.l.b16 %v749
    %v800 = vunpack.c.h.b16 %v749
    %v801 = vunpack.c.l.b16 %v750
    %v802 = vunpack.c.h.b16 %v750
    %v803 = vunpack.c.l.b16 %v751
    %v804 = vunpack.c.h.b16 %v751
    %v805 = vunpack.c.l.b16 %v752
    %v806 = vunpack.c.h.b16 %v752
    %v807 = vunpack.c.l.b16 %v753
    %v808 = vunpack.c.h.b16 %v753
    %v809 = vunpack.c.l.b16 %v754
    %v810 = vunpack.c.h.b16 %v754
    %v811 = vunpack.c.l.b16 %v755
    %v812 = vunpack.c.h.b16 %v755
    %v813 = vunpack.c.l.b16 %v756
    %v814 = vunpack.c.h.b16 %v756
    %v815 = vunpack.c.l.b16 %v757
    %v816 = vunpack.c.h.b16 %v757
    %v817 = vunpack.c.l.b16 %v758
    %v818 = vunpack.c.h.b16 %v758
    %v819 = vpack.c.b16 %v789, %v787
    %v820 = vpack.c.b16 %v790, %v788
    %v821 = vpack.c.b16 %v793, %v791
    %v822 = vpack.c.b16 %v794, %v792
    %v823 = vpack.c.b16 %v797, %v795
    %v824 = vpack.c.b16 %v798, %v796
    %v825 = vpack.c.b16 %v801, %v799
    %v826 = vpack.c.b16 %v802, %v800
    %v827 = vpack.c.b16 %v805, %v803
    %v828 = vpack.c.b16 %v806, %v804
    %v829 = vpack.c.b16 %v809, %v807
    %v830 = vpack.c.b16 %v810, %v808
    %v831 = vpack.c.b16 %v813, %v811
    %v832 = vpack.c.b16 %v814, %v812
    %v833 = vpack.c.b16 %v817, %v815
    %v834 = vpack.c.b16 %v818, %v816
    %851 = vmatprep.subr.bf16.mxu0 %v820
    %852 = vmatpush1.bf16.msra.mxu0 %v819
    %853 = vmatprep.subr.bf16.mxu0 %v822
    %854 = vmatpush1.bf16.msra.mxu0 %v821
    %855 = vmatprep.subr.bf16.mxu0 %v824
    %856 = vmatpush1.bf16.msra.mxu0 %v823
    %857 = vmatprep.subr.bf16.mxu0 %v826
    %858 = vmatpush1.bf16.msra.mxu0 %v825
    %859 = vmatprep.subr.bf16.mxu0 %v828
    %860 = vmatpush1.bf16.msra.mxu0 %v827
    %861 = vmatprep.subr.bf16.mxu0 %v830
    %862 = vmatpush1.bf16.msra.mxu0 %v829
    %863 = vmatprep.subr.bf16.mxu0 %v832
    %864 = vmatpush1.bf16.msra.mxu0 %v831
    %865 = vmatprep.subr.bf16.mxu0 %v834
    %866 = vmatpush1.bf16.msra.mxu0 %v833
    %867 = vmatprep.subr.bf16.mxu0 0
    %868 = vmatpush1.bf16.msra.mxu0 0
    %869 = vmatprep.subr.bf16.mxu0 0
    %870 = vmatpush1.bf16.msra.mxu0 0
    %871 = vmatprep.subr.bf16.mxu0 0
    %872 = vmatpush1.bf16.msra.mxu0 0
    %873 = vmatprep.subr.bf16.mxu0 0
    %874 = vmatpush1.bf16.msra.mxu0 0
    %875 = vmatprep.subr.bf16.mxu0 0
    %876 = vmatpush1.bf16.msra.mxu0 0
    %877 = vmatprep.subr.bf16.mxu0 0
    %878 = vmatpush1.bf16.msra.mxu0 0
    %879 = vmatprep.subr.bf16.mxu0 0
    %880 = vmatpush1.bf16.msra.mxu0 0
    %881 = vmatprep.subr.bf16.mxu0 0
    %882 = vmatpush1.bf16.msra.mxu0 0
    %883 = vmatprep.mubr.bf16.mxu0 0
    %884 = vmatmul.mubr.bf16.gmra.mrb[0].mxu0 %v742
    %v885 = vpop.f32.mrb[0].mxu0
    %v886 = vadd.f32 %v764, %v885
    %v887 = vpop.f32.mrb[0].mxu0
    %v888 = vadd.f32 %v768, %v887
    %v889 = vpop.f32.mrb[0].mxu0
    %v890 = vpop.f32.mrb[0].mxu0
    %891 = vdwg.mxu0
    %v892 = vmax.f32 %v886, 0.0
    %v893 = vmax.f32 %v888, 0.0
    %v894 = vpack.c.bf16 %v892, %v892
    %v895 = vpack.c.bf16 %v893, %v893
    %v896 = vld [vmem:[%s5] sm:$0xf]
    %v897 = vld [vmem:[%s5 + $0x4] sm:$0xf]
    %v898 = vld [vmem:[%s5 + $0x8] sm:$0xf]
    %v899 = vld [vmem:[%s5 + $0xc] sm:$0xf]
    %v900 = vld [vmem:[%s5 + $0x10] sm:$0xf]
    %v901 = vld [vmem:[%s5 + $0x14] sm:$0xf]
    %v902 = vld [vmem:[%s5 + $0x18] sm:$0xf]
    %v903 = vld [vmem:[%s5 + $0x1c] sm:$0xf]
    %v904 = vld [vmem:[%s5 + $0x20] sm:$0xf]
    %v905 = vld [vmem:[%s5 + $0x24] sm:$0xf]
    %v906 = vld [vmem:[%s5 + $0x28] sm:$0xf]
    %v907 = vld [vmem:[%s5 + $0x2c] sm:$0xf]
    %v908 = vld [vmem:[%s5 + $0x30] sm:$0xf]
    %v909 = vld [vmem:[%s5 + $0x34] sm:$0xf]
    %v910 = vld [vmem:[%s5 + $0x38] sm:$0xf]
    %v911 = vld [vmem:[%s5 + $0x3c] sm:$0xf]
    %v912 = vld [vmem:[%s6] sm:$0x1]
    %v914 = vlaneseq
    %v915 = vshrl.u32 %v914, 7
    %v916 = vsub.s32 0, %v915
    %v917 = vrot.slane %v912, %v916
    %v935 = vunpack.c.l.b16 %v896
    %v936 = vunpack.c.l.b16 %v897
    %v937 = vunpack.c.l.b16 %v898
    %v938 = vunpack.c.l.b16 %v899
    %v939 = vunpack.c.l.b16 %v900
    %v940 = vunpack.c.l.b16 %v901
    %v941 = vunpack.c.l.b16 %v902
    %v942 = vunpack.c.l.b16 %v903
    %v943 = vunpack.c.l.b16 %v904
    %v944 = vunpack.c.l.b16 %v905
    %v945 = vunpack.c.l.b16 %v906
    %v946 = vunpack.c.l.b16 %v907
    %v947 = vunpack.c.l.b16 %v908
    %v948 = vunpack.c.l.b16 %v909
    %v949 = vunpack.c.l.b16 %v910
    %v950 = vunpack.c.l.b16 %v911
    %v951 = vpack.c.b16 %v936, %v935
    %v952 = vpack.c.b16 %v938, %v937
    %v953 = vpack.c.b16 %v940, %v939
    %v954 = vpack.c.b16 %v942, %v941
    %v955 = vpack.c.b16 %v944, %v943
    %v956 = vpack.c.b16 %v946, %v945
    %v957 = vpack.c.b16 %v948, %v947
    %v958 = vpack.c.b16 %v950, %v949
    %967 = vmatprep.subr.bf16.mxu0 0
    %968 = vmatpush1.bf16.msra.mxu0 %v951
    %969 = vmatprep.subr.bf16.mxu0 0
    %970 = vmatpush1.bf16.msra.mxu0 %v952
    %971 = vmatprep.subr.bf16.mxu0 0
    %972 = vmatpush1.bf16.msra.mxu0 %v953
    %973 = vmatprep.subr.bf16.mxu0 0
    %974 = vmatpush1.bf16.msra.mxu0 %v954
    %975 = vmatprep.subr.bf16.mxu0 0
    %976 = vmatpush1.bf16.msra.mxu0 %v955
    %977 = vmatprep.subr.bf16.mxu0 0
    %978 = vmatpush1.bf16.msra.mxu0 %v956
    %979 = vmatprep.subr.bf16.mxu0 0
    %980 = vmatpush1.bf16.msra.mxu0 %v957
    %981 = vmatprep.subr.bf16.mxu0 0
    %982 = vmatpush1.bf16.msra.mxu0 %v958
    %983 = vmatprep.subr.bf16.mxu0 0
    %984 = vmatpush1.bf16.msra.mxu0 0
    %985 = vmatprep.subr.bf16.mxu0 0
    %986 = vmatpush1.bf16.msra.mxu0 0
    %987 = vmatprep.subr.bf16.mxu0 0
    %988 = vmatpush1.bf16.msra.mxu0 0
    %989 = vmatprep.subr.bf16.mxu0 0
    %990 = vmatpush1.bf16.msra.mxu0 0
    %991 = vmatprep.subr.bf16.mxu0 0
    %992 = vmatpush1.bf16.msra.mxu0 0
    %993 = vmatprep.subr.bf16.mxu0 0
    %994 = vmatpush1.bf16.msra.mxu0 0
    %995 = vmatprep.subr.bf16.mxu0 0
    %996 = vmatpush1.bf16.msra.mxu0 0
    %997 = vmatprep.subr.bf16.mxu0 0
    %998 = vmatpush1.bf16.msra.mxu0 0
    %999 = vmatprep.mubr.bf16.mxu0 0
    %1000 = vmatmul.mubr.bf16.gmra.mrb[0].mxu0 %v894
    %v1001 = vpop.f32.mrb[0].mxu0
    %v1002 = vadd.f32 %v917, %v1001
    %v1003 = vpop.f32.mrb[0].mxu0
    %v1004 = vpop.f32.mrb[0].mxu0
    %v1005 = vpop.f32.mrb[0].mxu0
    %1006 = vdwg.mxu0
    %v1007 = vld [vmem:[%s7] sm:$0xf]
    %v1008 = vld [vmem:[%s7 + $0x4] sm:$0xf]
    %v1009 = vld [vmem:[%s7 + $0x8] sm:$0xf]
    %v1010 = vld [vmem:[%s7 + $0xc] sm:$0xf]
    %v1011 = vld [vmem:[%s7 + $0x10] sm:$0xf]
    %v1012 = vld [vmem:[%s7 + $0x14] sm:$0xf]
    %v1013 = vld [vmem:[%s7 + $0x18] sm:$0xf]
    %v1014 = vld [vmem:[%s7 + $0x1c] sm:$0xf]
    %v1015 = vld [vmem:[%s7 + $0x20] sm:$0xf]
    %v1016 = vld [vmem:[%s7 + $0x24] sm:$0xf]
    %v1017 = vld [vmem:[%s7 + $0x28] sm:$0xf]
    %v1018 = vld [vmem:[%s7 + $0x2c] sm:$0xf]
    %v1019 = vld [vmem:[%s7 + $0x30] sm:$0xf]
    %v1020 = vld [vmem:[%s7 + $0x34] sm:$0xf]
    %v1021 = vld [vmem:[%s7 + $0x38] sm:$0xf]
    %v1022 = vld [vmem:[%s7 + $0x3c] sm:$0xf]
    %v1023 = vld [vmem:[%s8] sm:$0x1]
    %v1025 = vlaneseq
    %v1026 = vshrl.u32 %v1025, 7
    %v1027 = vsub.s32 0, %v1026
    %v1028 = vrot.slane %v1023, %v1027
    %v1046 = vunpack.c.l.b16 %v1007
    %v1047 = vunpack.c.l.b16 %v1008
    %v1048 = vunpack.c.l.b16 %v1009
    %v1049 = vunpack.c.l.b16 %v1010
    %v1050 = vunpack.c.l.b16 %v1011
    %v1051 = vunpack.c.l.b16 %v1012
    %v1052 = vunpack.c.l.b16 %v1013
    %v1053 = vunpack.c.l.b16 %v1014
    %v1054 = vunpack.c.l.b16 %v1015
    %v1055 = vunpack.c.l.b16 %v1016
    %v1056 = vunpack.c.l.b16 %v1017
    %v1057 = vunpack.c.l.b16 %v1018
    %v1058 = vunpack.c.l.b16 %v1019
    %v1059 = vunpack.c.l.b16 %v1020
    %v1060 = vunpack.c.l.b16 %v1021
    %v1061 = vunpack.c.l.b16 %v1022
    %v1062 = vpack.c.b16 %v1047, %v1046
    %v1063 = vpack.c.b16 %v1049, %v1048
    %v1064 = vpack.c.b16 %v1051, %v1050
    %v1065 = vpack.c.b16 %v1053, %v1052
    %v1066 = vpack.c.b16 %v1055, %v1054
    %v1067 = vpack.c.b16 %v1057, %v1056
    %v1068 = vpack.c.b16 %v1059, %v1058
    %v1069 = vpack.c.b16 %v1061, %v1060
    %1078 = vmatprep.subr.bf16.mxu0 0
    %1079 = vmatpush1.bf16.msra.mxu0 %v1062
    %1080 = vmatprep.subr.bf16.mxu0 0
    %1081 = vmatpush1.bf16.msra.mxu0 %v1063
    %1082 = vmatprep.subr.bf16.mxu0 0
    %1083 = vmatpush1.bf16.msra.mxu0 %v1064
    %1084 = vmatprep.subr.bf16.mxu0 0
    %1085 = vmatpush1.bf16.msra.mxu0 %v1065
    %1086 = vmatprep.subr.bf16.mxu0 0
    %1087 = vmatpush1.bf16.msra.mxu0 %v1066
    %1088 = vmatprep.subr.bf16.mxu0 0
    %1089 = vmatpush1.bf16.msra.mxu0 %v1067
    %1090 = vmatprep.subr.bf16.mxu0 0
    %1091 = vmatpush1.bf16.msra.mxu0 %v1068
    %1092 = vmatprep.subr.bf16.mxu0 0
    %1093 = vmatpush1.bf16.msra.mxu0 %v1069
    %1094 = vmatprep.subr.bf16.mxu0 0
    %1095 = vmatpush1.bf16.msra.mxu0 0
    %1096 = vmatprep.subr.bf16.mxu0 0
    %1097 = vmatpush1.bf16.msra.mxu0 0
    %1098 = vmatprep.subr.bf16.mxu0 0
    %1099 = vmatpush1.bf16.msra.mxu0 0
    %1100 = vmatprep.subr.bf16.mxu0 0
    %1101 = vmatpush1.bf16.msra.mxu0 0
    %1102 = vmatprep.subr.bf16.mxu0 0
    %1103 = vmatpush1.bf16.msra.mxu0 0
    %1104 = vmatprep.subr.bf16.mxu0 0
    %1105 = vmatpush1.bf16.msra.mxu0 0
    %1106 = vmatprep.subr.bf16.mxu0 0
    %1107 = vmatpush1.bf16.msra.mxu0 0
    %1108 = vmatprep.subr.bf16.mxu0 0
    %1109 = vmatpush1.bf16.msra.mxu0 0
    %1110 = vmatprep.mubr.bf16.mxu0 0
    %1111 = vmatmul.mubr.bf16.gmra.mrb[0].mxu0 %v895
    %v1112 = vpop.f32.mrb[0].mxu0
    %v1113 = vadd.f32 %v1028, %v1112
    %v1114 = vpop.f32.mrb[0].mxu0
    %v1115 = vpop.f32.mrb[0].mxu0
    %v1116 = vpop.f32.mrb[0].mxu0
    %1117 = vdwg.mxu0
    %v1118 = vmul.f32 %v1002, %v1002
    %1119 = vadd.xlane.f32.xlu0 %v1118
    %v1120 = vpop.xlane.xlu0 %1119
    %v1121 = vmax.f32 %v1120, 1e-24
    %v1122 = vrsqrt.pop %v1121
    %v1123 = vmul.f32 %v1002, %v1122
    %1124 = vst [vmem:[%s9] sm:$0xff] %v1123
    %1125 = vmax.xlane.f32.xlu0 %v1113
    %v1126 = vpop.xlane.xlu0 %1125
    %v1127 = vsub.f32 %v1113, %v1126
    %v1128 = vmul.f32 %v1127, 1.442695
    %v1129 = vpow.pop %v1128
    %1130 = vadd.xlane.f32.xlu0 %v1129
    %v1131 = vpop.xlane.xlu0 %1130
    %v1132 = vrcp.pop %v1131
    %v1133 = vmul.f32 %v1129, %v1132
    %1134 = vst [vmem:[%s9 + $0x8] sm:$0xff] %v1133
  $region45: #{_network_forward_impl.1} parent=0 // pred_fallthru
    _
  // Predicated region
  $region46: #{_network_forward_impl.1} parent=0 // pred_check
    _
  $region47: #{_network_forward_impl.1} parent=0 // pred_check_branch
    %1136 = sbr.rel (0) target = $region49
  $region48: #{_network_forward_impl.1} parent=0 // pred_region
    _
  $region49: #{_network_forward_impl.1} parent=0 // pred_fallthru
    _
  // Predicated region
  $region50: #{_network_forward_impl.1} parent=0 // pred_check
    _
  $region51: #{_network_forward_impl.1} parent=0 // pred_check_branch
    %1138 = sbr.rel (0) target = $region53
  $region52: #{_network_forward_impl.1} parent=0 // pred_region
    _
  $region53: #{_network_forward_impl.1} parent=0 // pred_fallthru
    _

// kernel: _network_forward_impl.1
$region0: #{_network_forward_impl.1}
  #allocation0 [shape = 'u32[]', space=smem, size = 0x4, offset = 0x4, fixed_abs, tag = 'smem constant byte address 0x4 - core index']
  #allocation1 [shape = 'u32[144,128]{1,0:T(1,128)}', space=vmem, size = 0x12000, scoped, tag = 'internal scratch']
  #allocation2 [shape = 'f32[8,128]{1,0:T(8,128)}', space=vmem, size = 0x1000, scoped, tag = 'scratch operand']
  %s0 = inlined_call_operand.vmem [shape: f32[8,1024], index: 0, kind: input, shape index: {}]
  %s1 = inlined_call_operand.vmem [shape: bf16[1024,128], index: 1, kind: input, shape index: {}]
  %s2 = inlined_call_operand.vmem [shape: f32[1,128], index: 2, kind: input, shape index: {}]
  %s3 = inlined_call_operand.vmem [shape: bf16[128,256], index: 3, kind: input, shape index: {}]
  %s4 = inlined_call_operand.vmem [shape: f32[1,256], index: 4, kind: input, shape index: {}]
  %s5 = inlined_call_operand.vmem [shape: bf16[128,128], index: 5, kind: input, shape index: {}]
  %s6 = inlined_call_operand.vmem [shape: f32[1,128], index: 6, kind: input, shape index: {}]
  %s7 = inlined_call_operand.vmem [shape: bf16[128,128], index: 7, kind: input, shape index: {}]
  %s8 = inlined_call_operand.vmem [shape: f32[1,128], index: 8, kind: input, shape index: {}]
  %s9 = inlined_call_operand.vmem [shape: f32[8,256], index: 9, kind: output, shape index: {}]
  %s10 = sld [smem:[#allocation0]]
  $region54: #{_network_forward_impl.1} parent=0
    _
  %s12 = ssub.s32 1, %s10
  %s13 = scalar_select 0, %s12, %s10
  // Predicated region
  $region2: #{_network_forward_impl.1} parent=0 // pred_check
    _
  $region3: #{_network_forward_impl.1} parent=0 // pred_check_branch
    %15 = sbr.rel (0) target = $region5
  $region4: #{_network_forward_impl.1} parent=0 // pred_region
    _
  $region5: #{_network_forward_impl.1} parent=0 // pred_fallthru
    _
  // Predicated region
  $region6: #{_network_forward_impl.1} parent=0 // pred_check
    _
  $region7: #{_network_forward_impl.1} parent=0 // pred_check_branch
    %17 = sbr.rel (0) target = $region9
  $region8: #{_network_forward_impl.1} parent=0 // pred_region
    _
  $region9: #{_network_forward_impl.1} parent=0 // pred_fallthru
    _
  // Predicated region
  $region10: #{_network_forward_impl.1} parent=0 // pred_check
    _
  $region11: #{_network_forward_impl.1} parent=0 // pred_check_branch
    %19 = sbr.rel (0) target = $region13
  $region12: #{_network_forward_impl.1} parent=0 // pred_region
    _
  $region13: #{_network_forward_impl.1} parent=0 // pred_fallthru
    _
  // Predicated region
  $region14: #{_network_forward_impl.1} parent=0 // pred_check
    _
  $region15: #{_network_forward_impl.1} parent=0 // pred_check_branch
    %21 = sbr.rel (0) target = $region17
  $region16: #{_network_forward_impl.1} parent=0 // pred_region
    _
  $region17: #{_network_forward_impl.1} parent=0 // pred_fallthru
    _
  // Predicated region
  $region18: #{_network_forward_impl.1} parent=0 // pred_check
    _
  $region19: #{_network_forward_impl.1} parent=0 // pred_check_branch
    %23 = sbr.rel (0) target = $region21
  $region20: #{_network_forward_impl.1} parent=0 // pred_region
    _
  $region21: #{_network_forward_impl.1} parent=0 // pred_fallthru
    _
  // Predicated region
  $region22: #{_network_forward_impl.1} parent=0 // pred_check
    _
  $region23: #{_network_forward_impl.1} parent=0 // pred_check_branch
    %25 = sbr.rel (0) target = $region25
  $region24: #{_network_forward_impl.1} parent=0 // pred_region
    _
  $region25: #{_network_forward_impl.1} parent=0 // pred_fallthru
    _
  // Predicated region
  $region26: #{_network_forward_impl.1} parent=0 // pred_check
    _
  $region27: #{_network_forward_impl.1} parent=0 // pred_check_branch
    %27 = sbr.rel (0) target = $region29
  $region28: #{_network_forward_impl.1} parent=0 // pred_region
    _
  $region29: #{_network_forward_impl.1} parent=0 // pred_fallthru
    _
  // Predicated region
  $region30: #{_network_forward_impl.1} parent=0 // pred_check
    _
  $region31: #{_network_forward_impl.1} parent=0 // pred_check_branch
    %29 = sbr.rel (0) target = $region33
  $region32: #{_network_forward_impl.1} parent=0 // pred_region
    _
  $region33: #{_network_forward_impl.1} parent=0 // pred_fallthru
    _
  // Predicated region
  $region34: #{_network_forward_impl.1} parent=0 // pred_check
    _
  $region35: #{_network_forward_impl.1} parent=0 // pred_check_branch
    %31 = sbr.rel (0) target = $region37
  $region36: #{_network_forward_impl.1} parent=0 // pred_region
    _
  $region37: #{_network_forward_impl.1} parent=0 // pred_fallthru
    _
  %v33 = vld [vmem:[%s0] sm:$0xff]
  %v34 = vld [vmem:[%s0 + $0x8] sm:$0xff]
  %v35 = vld [vmem:[%s0 + $0x10] sm:$0xff]
  %v36 = vld [vmem:[%s0 + $0x18] sm:$0xff]
  %v37 = vld [vmem:[%s0 + $0x20] sm:$0xff]
  %v38 = vld [vmem:[%s0 + $0x28] sm:$0xff]
  %v39 = vld [vmem:[%s0 + $0x30] sm:$0xff]
  %v40 = vld [vmem:[%s0 + $0x38] sm:$0xff]
  %v41 = vpack.c.bf16 %v33, %v33
  %v42 = vpack.c.bf16 %v34, %v34
  %v43 = vpack.c.bf16 %v35, %v35
  %v44 = vpack.c.bf16 %v36, %v36
  %v45 = vpack.c.bf16 %v37, %v37
  %v46 = vpack.c.bf16 %v38, %v38
  %v47 = vpack.c.bf16 %v39, %v39
  %v48 = vpack.c.bf16 %v40, %v40
  %v49 = vld [vmem:[%s1] sm:$0xf]
  %v50 = vld [vmem:[%s1 + $0x4] sm:$0xf]
  %v51 = vld [vmem:[%s1 + $0x8] sm:$0xf]
  %v52 = vld [vmem:[%s1 + $0xc] sm:$0xf]
  %v53 = vld [vmem:[%s1 + $0x10] sm:$0xf]
  %v54 = vld [vmem:[%s1 + $0x14] sm:$0xf]
  %v55 = vld [vmem:[%s1 + $0x18] sm:$0xf]
  %v56 = vld [vmem:[%s1 + $0x1c] sm:$0xf]
  %v57 = vld [vmem:[%s1 + $0x20] sm:$0xf]
  %v58 = vld [vmem:[%s1 + $0x24] sm:$0xf]
  %v59 = vld [vmem:[%s1 + $0x28] sm:$0xf]
  %v60 = vld [vmem:[%s1 + $0x2c] sm:$0xf]
  %v61 = vld [vmem:[%s1 + $0x30] sm:$0xf]
  %v62 = vld [vmem:[%s1 + $0x34] sm:$0xf]
  %v63 = vld [vmem:[%s1 + $0x38] sm:$0xf]
  %v64 = vld [vmem:[%s1 + $0x3c] sm:$0xf]
  %v65 = vld [vmem:[%s1 + $0x40] sm:$0xf]
  %v66 = vld [vmem:[%s1 + $0x44] sm:$0xf]
  %v67 = vld [vmem:[%s1 + $0x48] sm:$0xf]
  %v68 = vld [vmem:[%s1 + $0x4c] sm:$0xf]
  %v69 = vld [vmem:[%s1 + $0x50] sm:$0xf]
  %v70 = vld [vmem:[%s1 + $0x54] sm:$0xf]
  %v71 = vld [vmem:[%s1 + $0x58] sm:$0xf]
  %v72 = vld [vmem:[%s1 + $0x5c] sm:$0xf]
  %v73 = vld [vmem:[%s1 + $0x60] sm:$0xf]
  %v74 = vld [vmem:[%s1 + $0x64] sm:$0xf]
  %v75 = vld [vmem:[%s1 + $0x68] sm:$0xf]
  %v76 = vld [vmem:[%s1 + $0x6c] sm:$0xf]
  %v77 = vld [vmem:[%s1 + $0x70] sm:$0xf]
  %v78 = vld [vmem:[%s1 + $0x74] sm:$0xf]
  %v79 = vld [vmem:[%s1 + $0x78] sm:$0xf]
  %v80 = vld [vmem:[%s1 + $0x7c] sm:$0xf]
  %v81 = vld [vmem:[%s1 + $0x80] sm:$0xf]
  %v82 = vld [vmem:[%s1 + $0x84] sm:$0xf]
  %v83 = vld [vmem:[%s1 + $0x88] sm:$0xf]
  %v84 = vld [vmem:[%s1 + $0x8c] sm:$0xf]
  %v85 = vld [vmem:[%s1 + $0x90] sm:$0xf]
  %v86 = vld [vmem:[%s1 + $0x94] sm:$0xf]
  %v87 = vld [vmem:[%s1 + $0x98] sm:$0xf]
  %v88 = vld [vmem:[%s1 + $0x9c] sm:$0xf]
  %v89 = vld [vmem:[%s1 + $0xa0] sm:$0xf]
  %v90 = vld [vmem:[%s1 + $0xa4] sm:$0xf]
  %v91 = vld [vmem:[%s1 + $0xa8] sm:$0xf]
  %v92 = vld [vmem:[%s1 + $0xac] sm:$0xf]
  %v93 = vld [vmem:[%s1 + $0xb0] sm:$0xf]
  %v94 = vld [vmem:[%s1 + $0xb4] sm:$0xf]
  %v95 = vld [vmem:[%s1 + $0xb8] sm:$0xf]
  %v96 = vld [vmem:[%s1 + $0xbc] sm:$0xf]
  %v97 = vld [vmem:[%s1 + $0xc0] sm:$0xf]
  %v98 = vld [vmem:[%s1 + $0xc4] sm:$0xf]
  %v99 = vld [vmem:[%s1 + $0xc8] sm:$0xf]
  %v100 = vld [vmem:[%s1 + $0xcc] sm:$0xf]
  %v101 = vld [vmem:[%s1 + $0xd0] sm:$0xf]
  %v102 = vld [vmem:[%s1 + $0xd4] sm:$0xf]
  %v103 = vld [vmem:[%s1 + $0xd8] sm:$0xf]
  %v104 = vld [vmem:[%s1 + $0xdc] sm:$0xf]
  %v105 = vld [vmem:[%s1 + $0xe0] sm:$0xf]
  %v106 = vld [vmem:[%s1 + $0xe4] sm:$0xf]
  %v107 = vld [vmem:[%s1 + $0xe8] sm:$0xf]
  %v108 = vld [vmem:[%s1 + $0xec] sm:$0xf]
  %v109 = vld [vmem:[%s1 + $0xf0] sm:$0xf]
  %v110 = vld [vmem:[%s1 + $0xf4] sm:$0xf]
  %v111 = vld [vmem:[%s1 + $0xf8] sm:$0xf]
  %v112 = vld [vmem:[%s1 + $0xfc] sm:$0xf]
  %v113 = vld [vmem:[%s1 + $0x100] sm:$0xf]
  %v114 = vld [vmem:[%s1 + $0x104] sm:$0xf]
  %v115 = vld [vmem:[%s1 + $0x108] sm:$0xf]
  %v116 = vld [vmem:[%s1 + $0x10c] sm:$0xf]
  %v117 = vld [vmem:[%s1 + $0x110] sm:$0xf]
  %v118 = vld [vmem:[%s1 + $0x114] sm:$0xf]
  %v119 = vld [vmem:[%s1 + $0x118] sm:$0xf]
  %v120 = vld [vmem:[%s1 + $0x11c] sm:$0xf]
  %v121 = vld [vmem:[%s1 + $0x120] sm:$0xf]
  %v122 = vld [vmem:[%s1 + $0x124] sm:$0xf]
  %v123 = vld [vmem:[%s1 + $0x128] sm:$0xf]
  %v124 = vld [vmem:[%s1 + $0x12c] sm:$0xf]
  %v125 = vld [vmem:[%s1 + $0x130] sm:$0xf]
  %v126 = vld [vmem:[%s1 + $0x134] sm:$0xf]
  %v127 = vld [vmem:[%s1 + $0x138] sm:$0xf]
  %v128 = vld [vmem:[%s1 + $0x13c] sm:$0xf]
  %v129 = vld [vmem:[%s1 + $0x140] sm:$0xf]
  %v130 = vld [vmem:[%s1 + $0x144] sm:$0xf]
  %v131 = vld [vmem:[%s1 + $0x148] sm:$0xf]
  %v132 = vld [vmem:[%s1 + $0x14c] sm:$0xf]
  %v133 = vld [vmem:[%s1 + $0x150] sm:$0xf]
  %v134 = vld [vmem:[%s1 + $0x154] sm:$0xf]
  %v135 = vld [vmem:[%s1 + $0x158] sm:$0xf]
  %v136 = vld [vmem:[%s1 + $0x15c] sm:$0xf]
  %v137 = vld [vmem:[%s1 + $0x160] sm:$0xf]
  %v138 = vld [vmem:[%s1 + $0x164] sm:$0xf]
  %v139 = vld [vmem:[%s1 + $0x168] sm:$0xf]
  %v140 = vld [vmem:[%s1 + $0x16c] sm:$0xf]
  %v141 = vld [vmem:[%s1 + $0x170] sm:$0xf]
  %v142 = vld [vmem:[%s1 + $0x174] sm:$0xf]
  %v143 = vld [vmem:[%s1 + $0x178] sm:$0xf]
  %v144 = vld [vmem:[%s1 + $0x17c] sm:$0xf]
  %v145 = vld [vmem:[%s1 + $0x180] sm:$0xf]
  %v146 = vld [vmem:[%s1 + $0x184] sm:$0xf]
  %v147 = vld [vmem:[%s1 + $0x188] sm:$0xf]
  %v148 = vld [vmem:[%s1 + $0x18c] sm:$0xf]
  %v149 = vld [vmem:[%s1 + $0x190] sm:$0xf]
  %v150 = vld [vmem:[%s1 + $0x194] sm:$0xf]
  %v151 = vld [vmem:[%s1 + $0x198] sm:$0xf]
  %v152 = vld [vmem:[%s1 + $0x19c] sm:$0xf]
  %v153 = vld [vmem:[%s1 + $0x1a0] sm:$0xf]
  %v154 = vld [vmem:[%s1 + $0x1a4] sm:$0xf]
  %v155 = vld [vmem:[%s1 + $0x1a8] sm:$0xf]
  %v156 = vld [vmem:[%s1 + $0x1ac] sm:$0xf]
  %v157 = vld [vmem:[%s1 + $0x1b0] sm:$0xf]
  %v158 = vld [vmem:[%s1 + $0x1b4] sm:$0xf]
  %v159 = vld [vmem:[%s1 + $0x1b8] sm:$0xf]
  %v160 = vld [vmem:[%s1 + $0x1bc] sm:$0xf]
  %v161 = vld [vmem:[%s1 + $0x1c0] sm:$0xf]
  %v162 = vld [vmem:[%s1 + $0x1c4] sm:$0xf]
  %v163 = vld [vmem:[%s1 + $0x1c8] sm:$0xf]
  %v164 = vld [vmem:[%s1 + $0x1cc] sm:$0xf]
  %v165 = vld [vmem:[%s1 + $0x1d0] sm:$0xf]
  %v166 = vld [vmem:[%s1 + $0x1d4] sm:$0xf]
  %v167 = vld [vmem:[%s1 + $0x1d8] sm:$0xf]
  %v168 = vld [vmem:[%s1 + $0x1dc] sm:$0xf]
  %v169 = vld [vmem:[%s1 + $0x1e0] sm:$0xf]
  %v170 = vld [vmem:[%s1 + $0x1e4] sm:$0xf]
  %v171 = vld [vmem:[%s1 + $0x1e8] sm:$0xf]
  %v172 = vld [vmem:[%s1 + $0x1ec] sm:$0xf]
  %v173 = vld [vmem:[%s1 + $0x1f0] sm:$0xf]
  %v174 = vld [vmem:[%s1 + $0x1f4] sm:$0xf]
  %v175 = vld [vmem:[%s1 + $0x1f8] sm:$0xf]
  %v176 = vld [vmem:[%s1 + $0x1fc] sm:$0xf]
  %v305 = vunpack.c.l.b16 %v49
  %v306 = vunpack.c.l.b16 %v50
  %v307 = vunpack.c.l.b16 %v51
  %v308 = vunpack.c.l.b16 %v52
  %v309 = vunpack.c.l.b16 %v53
  %v310 = vunpack.c.l.b16 %v54
  %v311 = vunpack.c.l.b16 %v55
  %v312 = vunpack.c.l.b16 %v56
  %v313 = vunpack.c.l.b16 %v57
  %v314 = vunpack.c.l.b16 %v58
  %v315 = vunpack.c.l.b16 %v59
  %v316 = vunpack.c.l.b16 %v60
  %v317 = vunpack.c.l.b16 %v61
  %v318 = vunpack.c.l.b16 %v62
  %v319 = vunpack.c.l.b16 %v63
  %v320 = vunpack.c.l.b16 %v64
  %v321 = vunpack.c.l.b16 %v65
  %v322 = vunpack.c.l.b16 %v66
  %v323 = vunpack.c.l.b16 %v67
  %v324 = vunpack.c.l.b16 %v68
  %v325 = vunpack.c.l.b16 %v69
  %v326 = vunpack.c.l.b16 %v70
  %v327 = vunpack.c.l.b16 %v71
  %v328 = vunpack.c.l.b16 %v72
  %v329 = vunpack.c.l.b16 %v73
  %v330 = vunpack.c.l.b16 %v74
  %v331 = vunpack.c.l.b16 %v75
  %v332 = vunpack.c.l.b16 %v76
  %v333 = vunpack.c.l.b16 %v77
  %v334 = vunpack.c.l.b16 %v78
  %v335 = vunpack.c.l.b16 %v79
  %v336 = vunpack.c.l.b16 %v80
  %v337 = vunpack.c.l.b16 %v81
  %v338 = vunpack.c.l.b16 %v82
  %v339 = vunpack.c.l.b16 %v83
  %v340 = vunpack.c.l.b16 %v84
  %v341 = vunpack.c.l.b16 %v85
  %v342 = vunpack.c.l.b16 %v86
  %v343 = vunpack.c.l.b16 %v87
  %v344 = vunpack.c.l.b16 %v88
  %v345 = vunpack.c.l.b16 %v89
  %v346 = vunpack.c.l.b16 %v90
  %v347 = vunpack.c.l.b16 %v91
  %v348 = vunpack.c.l.b16 %v92
  %v349 = vunpack.c.l.b16 %v93
  %v350 = vunpack.c.l.b16 %v94
  %v351 = vunpack.c.l.b16 %v95
  %v352 = vunpack.c.l.b16 %v96
  %v353 = vunpack.c.l.b16 %v97
  %v354 = vunpack.c.l.b16 %v98
  %v355 = vunpack.c.l.b16 %v99
  %v356 = vunpack.c.l.b16 %v100
  %v357 = vunpack.c.l.b16 %v101
  %v358 = vunpack.c.l.b16 %v102
  %v359 = vunpack.c.l.b16 %v103
  %v360 = vunpack.c.l.b16 %v104
  %v361 = vunpack.c.l.b16 %v105
  %v362 = vunpack.c.l.b16 %v106
  %v363 = vunpack.c.l.b16 %v107
  %v364 = vunpack.c.l.b16 %v108
  %v365 = vunpack.c.l.b16 %v109
  %v366 = vunpack.c.l.b16 %v110
  %v367 = vunpack.c.l.b16 %v111
  %v368 = vunpack.c.l.b16 %v112
  %v369 = vunpack.c.l.b16 %v113
  %v370 = vunpack.c.l.b16 %v114
  %v371 = vunpack.c.l.b16 %v115
  %v372 = vunpack.c.l.b16 %v116
  %v373 = vunpack.c.l.b16 %v117
  %v374 = vunpack.c.l.b16 %v118
  %v375 = vunpack.c.l.b16 %v119
  %v376 = vunpack.c.l.b16 %v120
  %v377 = vunpack.c.l.b16 %v121
  %v378 = vunpack.c.l.b16 %v122
  %v379 = vunpack.c.l.b16 %v123
  %v380 = vunpack.c.l.b16 %v124
  %v381 = vunpack.c.l.b16 %v125
  %v382 = vunpack.c.l.b16 %v126
  %v383 = vunpack.c.l.b16 %v127
  %v384 = vunpack.c.l.b16 %v128
  %v385 = vunpack.c.l.b16 %v129
  %v386 = vunpack.c.l.b16 %v130
  %v387 = vunpack.c.l.b16 %v131
  %v388 = vunpack.c.l.b16 %v132
  %v389 = vunpack.c.l.b16 %v133
  %v390 = vunpack.c.l.b16 %v134
  %v391 = vunpack.c.l.b16 %v135
  %v392 = vunpack.c.l.b16 %v136
  %v393 = vunpack.c.l.b16 %v137
  %v394 = vunpack.c.l.b16 %v138
  %v395 = vunpack.c.l.b16 %v139
  %v396 = vunpack.c.l.b16 %v140
  %v397 = vunpack.c.l.b16 %v141
  %v398 = vunpack.c.l.b16 %v142
  %v399 = vunpack.c.l.b16 %v143
  %v400 = vunpack.c.l.b16 %v144
  %v401 = vunpack.c.l.b16 %v145
  %v402 = vunpack.c.l.b16 %v146
  %v403 = vunpack.c.l.b16 %v147
  %v404 = vunpack.c.l.b16 %v148
  %v405 = vunpack.c.l.b16 %v149
  %v406 = vunpack.c.l.b16 %v150
  %v407 = vunpack.c.l.b16 %v151
  %v408 = vunpack.c.l.b16 %v152
  %v409 = vunpack.c.l.b16 %v153
  %v410 = vunpack.c.l.b16 %v154
  %v411 = vunpack.c.l.b16 %v155
  %v412 = vunpack.c.l.b16 %v156
  %v413 = vunpack.c.l.b16 %v157
  %v414 = vunpack.c.l.b16 %v158
  %v415 = vunpack.c.l.b16 %v159
  %v416 = vunpack.c.l.b16 %v160
  %v417 = vunpack.c.l.b16 %v161
  %v418 = vunpack.c.l.b16 %v162
  %v419 = vunpack.c.l.b16 %v163
  %v420 = vunpack.c.l.b16 %v164
  %v421 = vunpack.c.l.b16 %v165
  %v422 = vunpack.c.l.b16 %v166
  %v423 = vunpack.c.l.b16 %v167
  %v424 = vunpack.c.l.b16 %v168
  %v425 = vunpack.c.l.b16 %v169
  %v426 = vunpack.c.l.b16 %v170
  %v427 = vunpack.c.l.b16 %v171
  %v428 = vunpack.c.l.b16 %v172
  %v429 = vunpack.c.l.b16 %v173
  %v430 = vunpack.c.l.b16 %v174
  %v431 = vunpack.c.l.b16 %v175
  %v432 = vunpack.c.l.b16 %v176
  %v433 = vpack.c.b16 %v306, %v305
  %v434 = vpack.c.b16 %v308, %v307
  %v435 = vpack.c.b16 %v310, %v309
  %v436 = vpack.c.b16 %v312, %v311
  %v437 = vpack.c.b16 %v314, %v313
  %v438 = vpack.c.b16 %v316, %v315
  %v439 = vpack.c.b16 %v318, %v317
  %v440 = vpack.c.b16 %v320, %v319
  %v441 = vpack.c.b16 %v322, %v321
  %v442 = vpack.c.b16 %v324, %v323
  %v443 = vpack.c.b16 %v326, %v325
  %v444 = vpack.c.b16 %v328, %v327
  %v445 = vpack.c.b16 %v330, %v329
  %v446 = vpack.c.b16 %v332, %v331
  %v447 = vpack.c.b16 %v334, %v333
  %v448 = vpack.c.b16 %v336, %v335
  %v449 = vpack.c.b16 %v338, %v337
  %v450 = vpack.c.b16 %v340, %v339
  %v451 = vpack.c.b16 %v342, %v341
  %v452 = vpack.c.b16 %v344, %v343
  %v453 = vpack.c.b16 %v346, %v345
  %v454 = vpack.c.b16 %v348, %v347
  %v455 = vpack.c.b16 %v350, %v349
  %v456 = vpack.c.b16 %v352, %v351
  %v457 = vpack.c.b16 %v354, %v353
  %v458 = vpack.c.b16 %v356, %v355
  %v459 = vpack.c.b16 %v358, %v357
  %v460 = vpack.c.b16 %v360, %v359
  %v461 = vpack.c.b16 %v362, %v361
  %v462 = vpack.c.b16 %v364, %v363
  %v463 = vpack.c.b16 %v366, %v365
  %v464 = vpack.c.b16 %v368, %v367
  %v465 = vpack.c.b16 %v370, %v369
  %v466 = vpack.c.b16 %v372, %v371
  %v467 = vpack.c.b16 %v374, %v373
  %v468 = vpack.c.b16 %v376, %v375
  %v469 = vpack.c.b16 %v378, %v377
  %v470 = vpack.c.b16 %v380, %v379
  %v471 = vpack.c.b16 %v382, %v381
  %v472 = vpack.c.b16 %v384, %v383
  %v473 = vpack.c.b16 %v386, %v385
  %v474 = vpack.c.b16 %v388, %v387
  %v475 = vpack.c.b16 %v390, %v389
  %v476 = vpack.c.b16 %v392, %v391
  %v477 = vpack.c.b16 %v394, %v393
  %v478 = vpack.c.b16 %v396, %v395
  %v479 = vpack.c.b16 %v398, %v397
  %v480 = vpack.c.b16 %v400, %v399
  %v481 = vpack.c.b16 %v402, %v401
  %v482 = vpack.c.b16 %v404, %v403
  %v483 = vpack.c.b16 %v406, %v405
  %v484 = vpack.c.b16 %v408, %v407
  %v485 = vpack.c.b16 %v410, %v409
  %v486 = vpack.c.b16 %v412, %v411
  %v487 = vpack.c.b16 %v414, %v413
  %v488 = vpack.c.b16 %v416, %v415
  %v489 = vpack.c.b16 %v418, %v417
  %v490 = vpack.c.b16 %v420, %v419
  %v491 = vpack.c.b16 %v422, %v421
  %v492 = vpack.c.b16 %v424, %v423
  %v493 = vpack.c.b16 %v426, %v425
  %v494 = vpack.c.b16 %v428, %v427
  %v495 = vpack.c.b16 %v430, %v429
  %v496 = vpack.c.b16 %v432, %v431
  %561 = vmatprep.subr.bf16.mxu0 0
  %562 = vmatpush1.bf16.msra.mxu0 %v433
  %563 = vmatprep.subr.bf16.mxu0 0
  %564 = vmatpush1.bf16.msra.mxu0 %v434
  %565 = vmatprep.subr.bf16.mxu0 0
  %566 = vmatpush1.bf16.msra.mxu0 %v435
  %567 = vmatprep.subr.bf16.mxu0 0
  %568 = vmatpush1.bf16.msra.mxu0 %v436
  %569 = vmatprep.subr.bf16.mxu0 0
  %570 = vmatpush1.bf16.msra.mxu0 %v437
  %571 = vmatprep.subr.bf16.mxu0 0
  %572 = vmatpush1.bf16.msra.mxu0 %v438
  %573 = vmatprep.subr.bf16.mxu0 0
  %574 = vmatpush1.bf16.msra.mxu0 %v439
  %575 = vmatprep.subr.bf16.mxu0 0
  %576 = vmatpush1.bf16.msra.mxu0 %v440
  %577 = vmatprep.subr.bf16.mxu0 0
  %578 = vmatpush1.bf16.msra.mxu0 %v441
  %579 = vmatprep.subr.bf16.mxu0 0
  %580 = vmatpush1.bf16.msra.mxu0 %v442
  %581 = vmatprep.subr.bf16.mxu0 0
  %582 = vmatpush1.bf16.msra.mxu0 %v443
  %583 = vmatprep.subr.bf16.mxu0 0
  %584 = vmatpush1.bf16.msra.mxu0 %v444
  %585 = vmatprep.subr.bf16.mxu0 0
  %586 = vmatpush1.bf16.msra.mxu0 %v445
  %587 = vmatprep.subr.bf16.mxu0 0
  %588 = vmatpush1.bf16.msra.mxu0 %v446
  %589 = vmatprep.subr.bf16.mxu0 0
  %590 = vmatpush1.bf16.msra.mxu0 %v447
  %591 = vmatprep.subr.bf16.mxu0 0
  %592 = vmatpush1.bf16.msra.mxu0 %v448
  %593 = vmatprep.mubr.bf16.mxu0 %v42
  %594 = vmatmul.mubr.bf16.gmra.mrb[0].mxu0 %v41
  %v595 = vpop.f32.mrb[0].mxu0
  %v596 = vadd.f32 0.0, %v595
  %v597 = vpop.f32.mrb[0].mxu0
  %v598 = vpop.f32.mrb[0].mxu0
  %v599 = vpop.f32.mrb[0].mxu0
  %600 = vdwg.mxu0
  %601 = vmatprep.subr.bf16.mxu0 0
  %602 = vmatpush1.bf16.msra.mxu0 %v449
  %603 = vmatprep.subr.bf16.mxu0 0
  %604 = vmatpush1.bf16.msra.mxu0 %v450
  %605 = vmatprep.subr.bf16.mxu0 0
  %606 = vmatpush1.bf16.msra.mxu0 %v451
  %607 = vmatprep.subr.bf16.mxu0 0
  %608 = vmatpush1.bf16.msra.mxu0 %v452
  %609 = vmatprep.subr.bf16.mxu0 0
  %610 = vmatpush1.bf16.msra.mxu0 %v453
  %611 = vmatprep.subr.bf16.mxu0 0
  %612 = vmatpush1.bf16.msra.mxu0 %v454
  %613 = vmatprep.subr.bf16.mxu0 0
  %614 = vmatpush1.bf16.msra.mxu0 %v455
  %615 = vmatprep.subr.bf16.mxu0 0
  %616 = vmatpush1.bf16.msra.mxu0 %v456
  %617 = vmatprep.subr.bf16.mxu0 0
  %618 = vmatpush1.bf16.msra.mxu0 %v457
  %619 = vmatprep.subr.bf16.mxu0 0
  %620 = vmatpush1.bf16.msra.mxu0 %v458
  %621 = vmatprep.subr.bf16.mxu0 0
  %622 = vmatpush1.bf16.msra.mxu0 %v459
  %623 = vmatprep.subr.bf16.mxu0 0
  %624 = vmatpush1.bf16.msra.mxu0 %v460
  %625 = vmatprep.subr.bf16.mxu0 0
  %626 = vmatpush1.bf16.msra.mxu0 %v461
  %627 = vmatprep.subr.bf16.mxu0 0
  %628 = vmatpush1.bf16.msra.mxu0 %v462
  %629 = vmatprep.subr.bf16.mxu0 0
  %630 = vmatpush1.bf16.msra.mxu0 %v463
  %631 = vmatprep.subr.bf16.mxu0 0
  %632 = vmatpush1.bf16.msra.mxu0 %v464
  %633 = vmatprep.mubr.bf16.mxu0 %v44
  %634 = vmatmul.mubr.bf16.gmra.mrb[0].mxu0 %v43
  %v635 = vpop.f32.mrb[0].mxu0
  %v636 = vadd.f32 %v596, %v635
  %v637 = vpop.f32.mrb[0].mxu0
  %v638 = vpop.f32.mrb[0].mxu0
  %v639 = vpop.f32.mrb[0].mxu0
  %640 = vdwg.mxu0
  %641 = vmatprep.subr.bf16.mxu0 0
  %642 = vmatpush1.bf16.msra.mxu0 %v465
  %643 = vmatprep.subr.bf16.mxu0 0
  %644 = vmatpush1.bf16.msra.mxu0 %v466
  %645 = vmatprep.subr.bf16.mxu0 0
  %646 = vmatpush1.bf16.msra.mxu0 %v467
  %647 = vmatprep.subr.bf16.mxu0 0
  %648 = vmatpush1.bf16.msra.mxu0 %v468
  %649 = vmatprep.subr.bf16.mxu0 0
  %650 = vmatpush1.bf16.msra.mxu0 %v469
  %651 = vmatprep.subr.bf16.mxu0 0
  %652 = vmatpush1.bf16.msra.mxu0 %v470
  %653 = vmatprep.subr.bf16.mxu0 0
  %654 = vmatpush1.bf16.msra.mxu0 %v471
  %655 = vmatprep.subr.bf16.mxu0 0
  %656 = vmatpush1.bf16.msra.mxu0 %v472
  %657 = vmatprep.subr.bf16.mxu0 0
  %658 = vmatpush1.bf16.msra.mxu0 %v473
  %659 = vmatprep.subr.bf16.mxu0 0
  %660 = vmatpush1.bf16.msra.mxu0 %v474
  %661 = vmatprep.subr.bf16.mxu0 0
  %662 = vmatpush1.bf16.msra.mxu0 %v475
  %663 = vmatprep.subr.bf16.mxu0 0
  %664 = vmatpush1.bf16.msra.mxu0 %v476
  %665 = vmatprep.subr.bf16.mxu0 0
  %666 = vmatpush1.bf16.msra.mxu0 %v477
  %667 = vmatprep.subr.bf16.mxu0 0
  %668 = vmatpush1.bf16.msra.mxu0 %v478
  %669 = vmatprep.subr.bf16.mxu0 0
  %670 = vmatpush1.bf16.msra.mxu0 %v479
  %671 = vmatprep.subr.bf16.mxu0 0
  %672 = vmatpush1.bf16.msra.mxu0 %v480
  %673 = vmatprep.mubr.bf16.mxu0 %v46
  %674 = vmatmul.mubr.bf16.gmra.mrb[0].mxu0 %v45
  %v675 = vpop.f32.mrb[0].mxu0
  %v676 = vadd.f32 %v636, %v675
  %v677 = vpop.f32.mrb[0].mxu0
  %v678 = vpop.f32.mrb[0].mxu0
  %v679 = vpop.f32.mrb[0].mxu0
  %680 = vdwg.mxu0
  %681 = vmatprep.subr.bf16.mxu0 0
  %682 = vmatpush1.bf16.msra.mxu0 %v481
  %683 = vmatprep.subr.bf16.mxu0 0
  %684 = vmatpush1.bf16.msra.mxu0 %v482
  %685 = vmatprep.subr.bf16.mxu0 0
  %686 = vmatpush1.bf16.msra.mxu0 %v483
  %687 = vmatprep.subr.bf16.mxu0 0
  %688 = vmatpush1.bf16.msra.mxu0 %v484
  %689 = vmatprep.subr.bf16.mxu0 0
  %690 = vmatpush1.bf16.msra.mxu0 %v485
  %691 = vmatprep.subr.bf16.mxu0 0
  %692 = vmatpush1.bf16.msra.mxu0 %v486
  %693 = vmatprep.subr.bf16.mxu0 0
  %694 = vmatpush1.bf16.msra.mxu0 %v487
  %695 = vmatprep.subr.bf16.mxu0 0
  %696 = vmatpush1.bf16.msra.mxu0 %v488
  %697 = vmatprep.subr.bf16.mxu0 0
  %698 = vmatpush1.bf16.msra.mxu0 %v489
  %699 = vmatprep.subr.bf16.mxu0 0
  %700 = vmatpush1.bf16.msra.mxu0 %v490
  %701 = vmatprep.subr.bf16.mxu0 0
  %702 = vmatpush1.bf16.msra.mxu0 %v491
  %703 = vmatprep.subr.bf16.mxu0 0
  %704 = vmatpush1.bf16.msra.mxu0 %v492
  %705 = vmatprep.subr.bf16.mxu0 0
  %706 = vmatpush1.bf16.msra.mxu0 %v493
  %707 = vmatprep.subr.bf16.mxu0 0
  %708 = vmatpush1.bf16.msra.mxu0 %v494
  %709 = vmatprep.subr.bf16.mxu0 0
  %710 = vmatpush1.bf16.msra.mxu0 %v495
  %711 = vmatprep.subr.bf16.mxu0 0
  %712 = vmatpush1.bf16.msra.mxu0 %v496
  %713 = vmatprep.mubr.bf16.mxu0 %v48
  %714 = vmatmul.mubr.bf16.gmra.mrb[0].mxu0 %v47
  %v715 = vpop.f32.mrb[0].mxu0
  %v716 = vadd.f32 %v676, %v715
  %v717 = vpop.f32.mrb[0].mxu0
  %v718 = vpop.f32.mrb[0].mxu0
  %v719 = vpop.f32.mrb[0].mxu0
  %720 = vdwg.mxu0
  %p721 = scmp.eq.s32.totalorder 0, 0
  // Predicated region
  $region38: #{_network_forward_impl.1} parent=0 // pred_check
    %p722 = pneg %p721
  $region39: #{_network_forward_impl.1} parent=0 // pred_check_branch
    %724 = sbr.rel (%p722) target = $region41
  $region40: #{_network_forward_impl.1} parent=0 // pred_region
    %725 = vst [vmem:[#allocation2] sm:$0xff] 0.0
  $region41: #{_network_forward_impl.1} parent=0 // pred_fallthru
    _
  %v726 = vld [vmem:[#allocation2] sm:$0xff]
  %v727 = vadd.f32 %v726, %v716
  %728 = vst [vmem:[#allocation2] sm:$0xff] %v727
  // Predicated region
  $region42: #{_network_forward_impl.1} parent=0 // pred_check
    %p729 = pneg %p721
  $region43: #{_network_forward_impl.1} parent=0 // pred_check_branch
    %731 = sbr.rel (%p729) target = $region45
  $region44: #{_network_forward_impl.1} parent=0 // pred_region
    %v732 = vld [vmem:[#allocation2] sm:$0xff]
    %v733 = vld [vmem:[%s2] sm:$0x1]
    %v735 = vlaneseq
    %v736 = vshrl.u32 %v735, 7
    %v737 = vsub.s32 0, %v736
    %v738 = vrot.slane %v733, %v737
    %v740 = vadd.f32 %v732, %v738
    %v741 = vmax.f32 %v740, 0.0
    %v742 = vpack.c.bf16 %v741, %v741
    %v743 = vld [vmem:[%s3] sm:$0xff]
    %v744 = vld [vmem:[%s3 + $0x8] sm:$0xff]
    %v745 = vld [vmem:[%s3 + $0x10] sm:$0xff]
    %v746 = vld [vmem:[%s3 + $0x18] sm:$0xff]
    %v747 = vld [vmem:[%s3 + $0x20] sm:$0xff]
    %v748 = vld [vmem:[%s3 + $0x28] sm:$0xff]
    %v749 = vld [vmem:[%s3 + $0x30] sm:$0xff]
    %v750 = vld [vmem:[%s3 + $0x38] sm:$0xff]
    %v751 = vld [vmem:[%s3 + $0x40] sm:$0xff]
    %v752 = vld [vmem:[%s3 + $0x48] sm:$0xff]
    %v753 = vld [vmem:[%s3 + $0x50] sm:$0xff]
    %v754 = vld [vmem:[%s3 + $0x58] sm:$0xff]
    %v755 = vld [vmem:[%s3 + $0x60] sm:$0xff]
    %v756 = vld [vmem:[%s3 + $0x68] sm:$0xff]
    %v757 = vld [vmem:[%s3 + $0x70] sm:$0xff]
    %v758 = vld [vmem:[%s3 + $0x78] sm:$0xff]
    %v759 = vld [vmem:[%s4] sm:$0x3]
    %v761 = vlaneseq
    %v762 = vshrl.u32 %v761, 7
    %v763 = vsub.s32 0, %v762
    %v764 = vrot.slane %v759, %v763
    %v765 = vlaneseq
    %v766 = vshrl.u32 %v765, 7
    %v767 = vsub.s32 1, %v766
    %v768 = vrot.slane %v759, %v767
    %v787 = vunpack.c.l.b16 %v743
    %v788 = vunpack.c.h.b16 %v743
    %v789 = vunpack.c.l.b16 %v744
    %v790 = vunpack.c.h.b16 %v744
    %v791 = vunpack.c.l.b16 %v745
    %v792 = vunpack.c.h.b16 %v745
    %v793 = vunpack.c.l.b16 %v746
    %v794 = vunpack.c.h.b16 %v746
    %v795 = vunpack.c.l.b16 %v747
    %v796 = vunpack.c.h.b16 %v747
    %v797 = vunpack.c.l.b16 %v748
    %v798 = vunpack.c.h.b16 %v748
    %v799 = vunpack.c.l.b16 %v749
    %v800 = vunpack.c.h.b16 %v749
    %v801 = vunpack.c.l.b16 %v750
    %v802 = vunpack.c.h.b16 %v750
    %v803 = vunpack.c.l.b16 %v751
    %v804 = vunpack.c.h.b16 %v751
    %v805 = vunpack.c.l.b16 %v752
    %v806 = vunpack.c.h.b16 %v752
    %v807 = vunpack.c.l.b16 %v753
    %v808 = vunpack.c.h.b16 %v753
    %v809 = vunpack.c.l.b16 %v754
    %v810 = vunpack.c.h.b16 %v754
    %v811 = vunpack.c.l.b16 %v755
    %v812 = vunpack.c.h.b16 %v755
    %v813 = vunpack.c.l.b16 %v756
    %v814 = vunpack.c.h.b16 %v756
    %v815 = vunpack.c.l.b16 %v757
    %v816 = vunpack.c.h.b16 %v757
    %v817 = vunpack.c.l.b16 %v758
    %v818 = vunpack.c.h.b16 %v758
    %v819 = vpack.c.b16 %v789, %v787
    %v820 = vpack.c.b16 %v790, %v788
    %v821 = vpack.c.b16 %v793, %v791
    %v822 = vpack.c.b16 %v794, %v792
    %v823 = vpack.c.b16 %v797, %v795
    %v824 = vpack.c.b16 %v798, %v796
    %v825 = vpack.c.b16 %v801, %v799
    %v826 = vpack.c.b16 %v802, %v800
    %v827 = vpack.c.b16 %v805, %v803
    %v828 = vpack.c.b16 %v806, %v804
    %v829 = vpack.c.b16 %v809, %v807
    %v830 = vpack.c.b16 %v810, %v808
    %v831 = vpack.c.b16 %v813, %v811
    %v832 = vpack.c.b16 %v814, %v812
    %v833 = vpack.c.b16 %v817, %v815
    %v834 = vpack.c.b16 %v818, %v816
    %851 = vmatprep.subr.bf16.mxu0 %v820
    %852 = vmatpush1.bf16.msra.mxu0 %v819
    %853 = vmatprep.subr.bf16.mxu0 %v822
    %854 = vmatpush1.bf16.msra.mxu0 %v821
    %855 = vmatprep.subr.bf16.mxu0 %v824
    %856 = vmatpush1.bf16.msra.mxu0 %v823
    %857 = vmatprep.subr.bf16.mxu0 %v826
    %858 = vmatpush1.bf16.msra.mxu0 %v825
    %859 = vmatprep.subr.bf16.mxu0 %v828
    %860 = vmatpush1.bf16.msra.mxu0 %v827
    %861 = vmatprep.subr.bf16.mxu0 %v830
    %862 = vmatpush1.bf16.msra.mxu0 %v829
    %863 = vmatprep.subr.bf16.mxu0 %v832
    %864 = vmatpush1.bf16.msra.mxu0 %v831
    %865 = vmatprep.subr.bf16.mxu0 %v834
    %866 = vmatpush1.bf16.msra.mxu0 %v833
    %867 = vmatprep.subr.bf16.mxu0 0
    %868 = vmatpush1.bf16.msra.mxu0 0
    %869 = vmatprep.subr.bf16.mxu0 0
    %870 = vmatpush1.bf16.msra.mxu0 0
    %871 = vmatprep.subr.bf16.mxu0 0
    %872 = vmatpush1.bf16.msra.mxu0 0
    %873 = vmatprep.subr.bf16.mxu0 0
    %874 = vmatpush1.bf16.msra.mxu0 0
    %875 = vmatprep.subr.bf16.mxu0 0
    %876 = vmatpush1.bf16.msra.mxu0 0
    %877 = vmatprep.subr.bf16.mxu0 0
    %878 = vmatpush1.bf16.msra.mxu0 0
    %879 = vmatprep.subr.bf16.mxu0 0
    %880 = vmatpush1.bf16.msra.mxu0 0
    %881 = vmatprep.subr.bf16.mxu0 0
    %882 = vmatpush1.bf16.msra.mxu0 0
    %883 = vmatprep.mubr.bf16.mxu0 0
    %884 = vmatmul.mubr.bf16.gmra.mrb[0].mxu0 %v742
    %v885 = vpop.f32.mrb[0].mxu0
    %v886 = vadd.f32 %v764, %v885
    %v887 = vpop.f32.mrb[0].mxu0
    %v888 = vadd.f32 %v768, %v887
    %v889 = vpop.f32.mrb[0].mxu0
    %v890 = vpop.f32.mrb[0].mxu0
    %891 = vdwg.mxu0
    %v892 = vmax.f32 %v886, 0.0
    %v893 = vmax.f32 %v888, 0.0
    %v894 = vpack.c.bf16 %v892, %v892
    %v895 = vpack.c.bf16 %v893, %v893
    %v896 = vld [vmem:[%s5] sm:$0xf]
    %v897 = vld [vmem:[%s5 + $0x4] sm:$0xf]
    %v898 = vld [vmem:[%s5 + $0x8] sm:$0xf]
    %v899 = vld [vmem:[%s5 + $0xc] sm:$0xf]
    %v900 = vld [vmem:[%s5 + $0x10] sm:$0xf]
    %v901 = vld [vmem:[%s5 + $0x14] sm:$0xf]
    %v902 = vld [vmem:[%s5 + $0x18] sm:$0xf]
    %v903 = vld [vmem:[%s5 + $0x1c] sm:$0xf]
    %v904 = vld [vmem:[%s5 + $0x20] sm:$0xf]
    %v905 = vld [vmem:[%s5 + $0x24] sm:$0xf]
    %v906 = vld [vmem:[%s5 + $0x28] sm:$0xf]
    %v907 = vld [vmem:[%s5 + $0x2c] sm:$0xf]
    %v908 = vld [vmem:[%s5 + $0x30] sm:$0xf]
    %v909 = vld [vmem:[%s5 + $0x34] sm:$0xf]
    %v910 = vld [vmem:[%s5 + $0x38] sm:$0xf]
    %v911 = vld [vmem:[%s5 + $0x3c] sm:$0xf]
    %v912 = vld [vmem:[%s6] sm:$0x1]
    %v914 = vlaneseq
    %v915 = vshrl.u32 %v914, 7
    %v916 = vsub.s32 0, %v915
    %v917 = vrot.slane %v912, %v916
    %v935 = vunpack.c.l.b16 %v896
    %v936 = vunpack.c.l.b16 %v897
    %v937 = vunpack.c.l.b16 %v898
    %v938 = vunpack.c.l.b16 %v899
    %v939 = vunpack.c.l.b16 %v900
    %v940 = vunpack.c.l.b16 %v901
    %v941 = vunpack.c.l.b16 %v902
    %v942 = vunpack.c.l.b16 %v903
    %v943 = vunpack.c.l.b16 %v904
    %v944 = vunpack.c.l.b16 %v905
    %v945 = vunpack.c.l.b16 %v906
    %v946 = vunpack.c.l.b16 %v907
    %v947 = vunpack.c.l.b16 %v908
    %v948 = vunpack.c.l.b16 %v909
    %v949 = vunpack.c.l.b16 %v910
    %v950 = vunpack.c.l.b16 %v911
    %v951 = vpack.c.b16 %v936, %v935
    %v952 = vpack.c.b16 %v938, %v937
    %v953 = vpack.c.b16 %v940, %v939
    %v954 = vpack.c.b16 %v942, %v941
    %v955 = vpack.c.b16 %v944, %v943
    %v956 = vpack.c.b16 %v946, %v945
    %v957 = vpack.c.b16 %v948, %v947
    %v958 = vpack.c.b16 %v950, %v949
    %967 = vmatprep.subr.bf16.mxu0 0
    %968 = vmatpush1.bf16.msra.mxu0 %v951
    %969 = vmatprep.subr.bf16.mxu0 0
    %970 = vmatpush1.bf16.msra.mxu0 %v952
    %971 = vmatprep.subr.bf16.mxu0 0
    %972 = vmatpush1.bf16.msra.mxu0 %v953
    %973 = vmatprep.subr.bf16.mxu0 0
    %974 = vmatpush1.bf16.msra.mxu0 %v954
    %975 = vmatprep.subr.bf16.mxu0 0
    %976 = vmatpush1.bf16.msra.mxu0 %v955
    %977 = vmatprep.subr.bf16.mxu0 0
    %978 = vmatpush1.bf16.msra.mxu0 %v956
    %979 = vmatprep.subr.bf16.mxu0 0
    %980 = vmatpush1.bf16.msra.mxu0 %v957
    %981 = vmatprep.subr.bf16.mxu0 0
    %982 = vmatpush1.bf16.msra.mxu0 %v958
    %983 = vmatprep.subr.bf16.mxu0 0
    %984 = vmatpush1.bf16.msra.mxu0 0
    %985 = vmatprep.subr.bf16.mxu0 0
    %986 = vmatpush1.bf16.msra.mxu0 0
    %987 = vmatprep.subr.bf16.mxu0 0
    %988 = vmatpush1.bf16.msra.mxu0 0
    %989 = vmatprep.subr.bf16.mxu0 0
    %990 = vmatpush1.bf16.msra.mxu0 0
    %991 = vmatprep.subr.bf16.mxu0 0
    %992 = vmatpush1.bf16.msra.mxu0 0
    %993 = vmatprep.subr.bf16.mxu0 0
    %994 = vmatpush1.bf16.msra.mxu0 0
    %995 = vmatprep.subr.bf16.mxu0 0
    %996 = vmatpush1.bf16.msra.mxu0 0
    %997 = vmatprep.subr.bf16.mxu0 0
    %998 = vmatpush1.bf16.msra.mxu0 0
    %999 = vmatprep.mubr.bf16.mxu0 0
    %1000 = vmatmul.mubr.bf16.gmra.mrb[0].mxu0 %v894
    %v1001 = vpop.f32.mrb[0].mxu0
    %v1002 = vadd.f32 %v917, %v1001
    %v1003 = vpop.f32.mrb[0].mxu0
    %v1004 = vpop.f32.mrb[0].mxu0
    %v1005 = vpop.f32.mrb[0].mxu0
    %1006 = vdwg.mxu0
    %v1007 = vld [vmem:[%s7] sm:$0xf]
    %v1008 = vld [vmem:[%s7 + $0x4] sm:$0xf]
    %v1009 = vld [vmem:[%s7 + $0x8] sm:$0xf]
    %v1010 = vld [vmem:[%s7 + $0xc] sm:$0xf]
    %v1011 = vld [vmem:[%s7 + $0x10] sm:$0xf]
    %v1012 = vld [vmem:[%s7 + $0x14] sm:$0xf]
    %v1013 = vld [vmem:[%s7 + $0x18] sm:$0xf]
    %v1014 = vld [vmem:[%s7 + $0x1c] sm:$0xf]
    %v1015 = vld [vmem:[%s7 + $0x20] sm:$0xf]
    %v1016 = vld [vmem:[%s7 + $0x24] sm:$0xf]
    %v1017 = vld [vmem:[%s7 + $0x28] sm:$0xf]
    %v1018 = vld [vmem:[%s7 + $0x2c] sm:$0xf]
    %v1019 = vld [vmem:[%s7 + $0x30] sm:$0xf]
    %v1020 = vld [vmem:[%s7 + $0x34] sm:$0xf]
    %v1021 = vld [vmem:[%s7 + $0x38] sm:$0xf]
    %v1022 = vld [vmem:[%s7 + $0x3c] sm:$0xf]
    %v1023 = vld [vmem:[%s8] sm:$0x1]
    %v1025 = vlaneseq
    %v1026 = vshrl.u32 %v1025, 7
    %v1027 = vsub.s32 0, %v1026
    %v1028 = vrot.slane %v1023, %v1027
    %v1046 = vunpack.c.l.b16 %v1007
    %v1047 = vunpack.c.l.b16 %v1008
    %v1048 = vunpack.c.l.b16 %v1009
    %v1049 = vunpack.c.l.b16 %v1010
    %v1050 = vunpack.c.l.b16 %v1011
    %v1051 = vunpack.c.l.b16 %v1012
    %v1052 = vunpack.c.l.b16 %v1013
    %v1053 = vunpack.c.l.b16 %v1014
    %v1054 = vunpack.c.l.b16 %v1015
    %v1055 = vunpack.c.l.b16 %v1016
    %v1056 = vunpack.c.l.b16 %v1017
    %v1057 = vunpack.c.l.b16 %v1018
    %v1058 = vunpack.c.l.b16 %v1019
    %v1059 = vunpack.c.l.b16 %v1020
    %v1060 = vunpack.c.l.b16 %v1021
    %v1061 = vunpack.c.l.b16 %v1022
    %v1062 = vpack.c.b16 %v1047, %v1046
    %v1063 = vpack.c.b16 %v1049, %v1048
    %v1064 = vpack.c.b16 %v1051, %v1050
    %v1065 = vpack.c.b16 %v1053, %v1052
    %v1066 = vpack.c.b16 %v1055, %v1054
    %v1067 = vpack.c.b16 %v1057, %v1056
    %v1068 = vpack.c.b16 %v1059, %v1058
    %v1069 = vpack.c.b16 %v1061, %v1060
    %1078 = vmatprep.subr.bf16.mxu0 0
    %1079 = vmatpush1.bf16.msra.mxu0 %v1062
    %1080 = vmatprep.subr.bf16.mxu0 0
    %1081 = vmatpush1.bf16.msra.mxu0 %v1063
    %1082 = vmatprep.subr.bf16.mxu0 0
    %1083 = vmatpush1.bf16.msra.mxu0 %v1064
    %1084 = vmatprep.subr.bf16.mxu0 0
    %1085 = vmatpush1.bf16.msra.mxu0 %v1065
    %1086 = vmatprep.subr.bf16.mxu0 0
    %1087 = vmatpush1.bf16.msra.mxu0 %v1066
    %1088 = vmatprep.subr.bf16.mxu0 0
    %1089 = vmatpush1.bf16.msra.mxu0 %v1067
    %1090 = vmatprep.subr.bf16.mxu0 0
    %1091 = vmatpush1.bf16.msra.mxu0 %v1068
    %1092 = vmatprep.subr.bf16.mxu0 0
    %1093 = vmatpush1.bf16.msra.mxu0 %v1069
    %1094 = vmatprep.subr.bf16.mxu0 0
    %1095 = vmatpush1.bf16.msra.mxu0 0
    %1096 = vmatprep.subr.bf16.mxu0 0
    %1097 = vmatpush1.bf16.msra.mxu0 0
    %1098 = vmatprep.subr.bf16.mxu0 0
    %1099 = vmatpush1.bf16.msra.mxu0 0
    %1100 = vmatprep.subr.bf16.mxu0 0
    %1101 = vmatpush1.bf16.msra.mxu0 0
    %1102 = vmatprep.subr.bf16.mxu0 0
    %1103 = vmatpush1.bf16.msra.mxu0 0
    %1104 = vmatprep.subr.bf16.mxu0 0
    %1105 = vmatpush1.bf16.msra.mxu0 0
    %1106 = vmatprep.subr.bf16.mxu0 0
    %1107 = vmatpush1.bf16.msra.mxu0 0
    %1108 = vmatprep.subr.bf16.mxu0 0
    %1109 = vmatpush1.bf16.msra.mxu0 0
    %1110 = vmatprep.mubr.bf16.mxu0 0
    %1111 = vmatmul.mubr.bf16.gmra.mrb[0].mxu0 %v895
    %v1112 = vpop.f32.mrb[0].mxu0
    %v1113 = vadd.f32 %v1028, %v1112
    %v1114 = vpop.f32.mrb[0].mxu0
    %v1115 = vpop.f32.mrb[0].mxu0
    %v1116 = vpop.f32.mrb[0].mxu0
    %1117 = vdwg.mxu0
    %v1118 = vmul.f32 %v1002, %v1002
    %1119 = vadd.xlane.f32.xlu0 %v1118
    %v1120 = vpop.xlane.xlu0 %1119
    %v1121 = vmax.f32 %v1120, 1e-24
    %v1122 = vrsqrt.pop %v1121
    %v1123 = vmul.f32 %v1002, %v1122
    %1124 = vst [vmem:[%s9] sm:$0xff] %v1123
    %1125 = vmax.xlane.f32.xlu0 %v1113
    %v1126 = vpop.xlane.xlu0 %1125
    %v1127 = vsub.f32 %v1113, %v1126
    %v1128 = vmul.f32 %v1127, 1.442695
    %v1129 = vpow.pop %v1128
    %1130 = vadd.xlane.f32.xlu0 %v1129
    %v1131 = vpop.xlane.xlu0 %1130
    %v1132 = vrcp.pop %v1131
    %v1133 = vmul.f32 %v1129, %v1132
    %1134 = vst [vmem:[%s9 + $0x8] sm:$0xff] %v1133
  $region45: #{_network_forward_impl.1} parent=0 // pred_fallthru
    _
  // Predicated region
  $region46: #{_network_forward_impl.1} parent=0 // pred_check
    _
  $region47: #{_network_forward_impl.1} parent=0 // pred_check_branch
    %1136 = sbr.rel (0) target = $region49
  $region48: #{_network_forward_impl.1} parent=0 // pred_region
    _
  $region49: #{_network_forward_impl.1} parent=0 // pred_fallthru
    _
  // Predicated region
  $region50: #{_network_forward_impl.1} parent=0 // pred_check
    _
  $region51: #{_network_forward_impl.1} parent=0 // pred_check_branch
    %1138 = sbr.rel (0) target = $region53
  $region52: #{_network_forward_impl.1} parent=0 // pred_region
    _
  $region53: #{_network_forward_impl.1} parent=0 // pred_fallthru
    _

</llo_original>
